<compile_context>
chip_gen: v6e
topology: v6e:2x2x1
jax: 0.10.0
libtpu: 0.0.40
codegen_flags: <defaults>
</compile_context>

<pallas_src>
import math
import functools

import jax
import jax.numpy as jnp
from jax import lax
from jax.experimental import pallas as pl
from jax.experimental.pallas import tpu as pltpu

# 32 MiB: within the scoped default on v5e/v6e and leaves headroom on v7x (64 MiB phys).
_VMEM_LIMIT_BYTES = 32 * 1024 * 1024
_MASK_VALUE = -0.7 * float(jnp.finfo(jnp.float32).max)


def _round_up(a, b):
    return ((a + b - 1) // b) * b


def _choose_tiles(S, q_tile, kv_tile, row_tile):
    """Padded sequence length + tile sizes.

    Tiles are expected to be power-of-two multiples of 8 (defaults 128/256/256),
    so every tile divides the largest one and hence divides S_pad.
    """
    S8 = _round_up(S, 8)
    base = max(q_tile, kv_tile, row_tile)
    if S8 <= base:
        return S8, S8, S8, S8            # single tile along the sequence
    return _round_up(S8, base), q_tile, kv_tile, row_tile


def _qkv_proj_kernel(x_ref, w_ref, b_ref, qkv_ref, *, compute_dtype):
    """One (TR, H) row tile times the fused (H, 3H) projection weight."""
    x = x_ref[0].astype(compute_dtype)                                   # (TR, H)
    acc = jnp.dot(x, w_ref[...], preferred_element_type=jnp.float32)    # (TR, 3H), MXU f32 acc
    qkv_ref[0] = (acc + b_ref[...]).astype(qkv_ref.dtype)


def _flash_attn_kernel(x_ref, q_ref, k_ref, v_ref, o_ref,
                       m_sc, l_sc, acc_sc, *, seq_len, kv_tile, needs_mask):
    """Online-softmax attention over kv tiles; residual added at the last kv step."""
    ki = pl.program_id(2)

    @pl.when(ki == 0)
    def _init():
        m_sc[...] = jnp.full(m_sc.shape, -jnp.inf, m_sc.dtype)
        l_sc[...] = jnp.zeros(l_sc.shape, l_sc.dtype)
        acc_sc[...] = jnp.zeros(acc_sc.shape, acc_sc.dtype)

    q = q_ref[0]                                    # (TQ, H)   packed qkv dtype (bf16 default)
    k = k_ref[0]                                    # (TKV, H)
    v = v_ref[0]                                    # (TKV, H)

    # scores = q @ k^T; the 1/sqrt(H) scale is already folded into the q projection.
    # Contract H of both operands directly on the MXU (no XLU transpose of k).
    s = lax.dot_general(q, k, (((1,), (1,)), ((), ())),
                        preferred_element_type=jnp.float32)              # (TQ, TKV)

    if needs_mask:  # static python bool: only emitted when S was padded
        kv_pos = ki * kv_tile + lax.broadcasted_iota(jnp.int32, (1, kv_tile), 1)
        s = jnp.where(kv_pos < seq_len, s, _MASK_VALUE)

    # Online softmax update (all softmax / elementwise math kept in f32).
    m_prev = m_sc[...]
    m_new = jnp.maximum(m_prev, jnp.max(s, axis=-1, keepdims=True))
    alpha = jnp.exp(m_prev - m_new)
    p = jnp.exp(s - m_new)
    l_sc[...] = alpha * l_sc[...] + jnp.sum(p, axis=-1, keepdims=True)
    acc_sc[...] = alpha * acc_sc[...] + jnp.dot(
        p.astype(v.dtype), v, preferred_element_type=jnp.float32)
    m_sc[...] = m_new

    @pl.when(ki == pl.num_programs(2) - 1)
    def _finalize():
        inv_l = pl.reciprocal(l_sc[...], approx=True)   # EUP slot, frees the VALU
        out = x_ref[0].astype(jnp.float32) + acc_sc[...] * inv_l
        o_ref[0] = out.astype(o_ref.dtype)


def self_attention(x, wq, bq, wk, bk, wv, bv, *,
                   compute_dtype=jnp.bfloat16, qkv_dtype=jnp.bfloat16,
                   q_tile=128, kv_tile=256, row_tile=256):
    """x: (B, S, H); w*: (H, H) stored as (in, out) == torch weight.T; b*: (H,).

    compute_dtype: dtype of the MXU matmul inputs (accumulation is always f32,
    softmax stays in f32).  bf16 by default: f32 MXU matmuls are emulated with
    multiple bf16 passes on every TPU generation, so bf16 inputs give ~3-4x MXU
    throughput and halve the packed-qkv HBM traffic.
    qkv_dtype: storage dtype of the packed q/k/v intermediate (bf16 default).
    """
    B, S, H = x.shape
    # TODO(synk): support H not a multiple of 128 (pad the lane dim of the packed qkv).
    assert H % 128 == 0, "hidden_dim must be a multiple of 128"
    compute_dtype = jnp.dtype(compute_dtype)
    qkv_dtype = jnp.dtype(qkv_dtype)

    # Fused projection weight/bias; fold the 1/sqrt(H) softmax scale into the q
    # projection (one-time constant weight transform, not a per-call activation scale).
    scale = 1.0 / math.sqrt(H)
    w3 = jnp.concatenate([wq * scale, wk, wv], axis=1).astype(compute_dtype)   # (H, 3H)
    b3 = jnp.concatenate([bq * scale, bk, bv]).reshape(1, 3 * H).astype(jnp.float32)

    S_pad, TQ, TKV, TR = _choose_tiles(S, q_tile, kv_tile, row_tile)
    # v7x megacore: keep at least 2 parallel grid units when possible.
    while B * (S_pad // TQ) < 2 and TQ % 16 == 0 and TQ > 8:
        TQ //= 2
    needs_mask = S_pad != S
    x_p = jnp.pad(x, ((0, 0), (0, S_pad - S), (0, 0))) if needs_mask else x

    cd = compute_dtype.itemsize
    qd = qkv_dtype.itemsize
    x_bytes = x_p.size * x_p.dtype.itemsize
    qkv_bytes = B * S_pad * 3 * H * qd

    # ---- kernel 1: fused QKV projection -> packed (B, S_pad, 3H) ----
    qkv = pl.pallas_call(
        functools.partial(_qkv_proj_kernel, compute_dtype=compute_dtype),
        out_shape=jax.ShapeDtypeStruct((B, S_pad, 3 * H), qkv_dtype),
        grid_spec=pltpu.PrefetchScalarGridSpec(
            num_scalar_prefetch=0,
            grid=(B, S_pad // TR),
            in_specs=[
                pl.BlockSpec((1, TR, H), lambda b, r: (b, r, 0)),     # x row tile
                pl.BlockSpec((H, 3 * H), lambda b, r: (0, 0)),        # fused W (resident)
                pl.BlockSpec((1, 3 * H), lambda b, r: (0, 0)),        # fused bias
            ],
            out_specs=pl.BlockSpec((1, TR, 3 * H), lambda b, r: (b, r, 0)),
        ),
        compiler_params=pltpu.CompilerParams(
            dimension_semantics=("parallel", "parallel"),
            vmem_limit_bytes=_VMEM_LIMIT_BYTES),
        cost_estimate=pl.CostEstimate(
            flops=int(2 * B * S_pad * H * 3 * H),
            transcendentals=0,
            bytes_accessed=int(x_bytes + w3.size * cd + b3.size * 4 + qkv_bytes)),
    )(x_p, w3, b3)

    # ---- kernel 2: flash attention (online softmax over kv tiles) + residual ----
    # TODO(synk): when one batch's K+V fit comfortably in VMEM and S_pad//TQ is
    # large, keep K/V resident per batch (grid=(B, S//TQ), in-kernel kv loop) to
    # avoid re-streaming them from HBM S_pad//TQ times.
    n_q_tiles = S_pad // TQ
    out = pl.pallas_call(
        functools.partial(_flash_attn_kernel, seq_len=S, kv_tile=TKV,
                          needs_mask=needs_mask),
        out_shape=jax.ShapeDtypeStruct((B, S_pad, H), x.dtype),
        grid_spec=pltpu.PrefetchScalarGridSpec(
            num_scalar_prefetch=0,
            grid=(B, n_q_tiles, S_pad // TKV),
            in_specs=[
                pl.BlockSpec((1, TQ, H), lambda b, qi, ki: (b, qi, 0)),    # x (residual)
                pl.BlockSpec((1, TQ, H), lambda b, qi, ki: (b, qi, 0)),    # q view (cols 0:H)
                pl.BlockSpec((1, TKV, H), lambda b, qi, ki: (b, ki, 1)),   # k view (cols H:2H)
                pl.BlockSpec((1, TKV, H), lambda b, qi, ki: (b, ki, 2)),   # v view (cols 2H:3H)
            ],
            out_specs=pl.BlockSpec((1, TQ, H), lambda b, qi, ki: (b, qi, 0)),
            scratch_shapes=[
                pltpu.VMEM((TQ, 1), jnp.float32),   # running max
                pltpu.VMEM((TQ, 1), jnp.float32),   # running denominator
                pltpu.VMEM((TQ, H), jnp.float32),   # output accumulator
            ],
        ),
        compiler_params=pltpu.CompilerParams(
            dimension_semantics=("parallel", "parallel", "arbitrary"),
            vmem_limit_bytes=_VMEM_LIMIT_BYTES),
        cost_estimate=pl.CostEstimate(
            flops=int(4 * B * S_pad * S_pad * H),
            transcendentals=int(B * S_pad * S_pad),
            bytes_accessed=int(x_bytes
                               + B * S_pad * H * qd                     # q streamed once
                               + 2 * B * S_pad * H * qd * n_q_tiles     # k, v per q tile
                               + B * S_pad * H * x.dtype.itemsize)),
    )(x_p, qkv, qkv, qkv)

    return out[:, :S, :] if needs_mask else out


def reference(x, wq, bq, wk, bk, wv, bv):
    H = x.shape[-1]
    q = x @ wq + bq
    k = x @ wk + bk
    v = x @ wv + bv
    scores = jnp.einsum("bsh,bth->bst", q, k) / math.sqrt(H)
    attn = jax.nn.softmax(scores, axis=-1)
    return x + jnp.einsum("bst,bth->bsh", attn, v)


if __name__ == "__main__":
    H = 256   # hidden_dim of the PyTorch module

    key = jax.random.PRNGKey(0)
    ks = jax.random.split(key, 7)

    # nn.Linear-style init: uniform(-1/sqrt(H), 1/sqrt(H)); weights stored as
    # (H_in, H_out) == torch_weight.T.
    bound = 1.0 / math.sqrt(H)
    init = lambda k, shape: jax.random.uniform(k, shape, jnp.float32, -bound, bound)
    wq, wk, wv = init(ks[1], (H, H)), init(ks[2], (H, H)), init(ks[3], (H, H))
    bq, bk, bv = init(ks[4], (H,)), init(ks[5], (H,)), init(ks[6], (H,))

    # --- main check: S divisible by the tiles ---
    B, S = 2, 256
    x = jax.random.normal(ks[0], (B, S, H), dtype=jnp.float32)
    ref = reference(x, wq, bq, wk, bk, wv, bv)

    # strict f32 path (approx reciprocal accounts for the tolerance)
    out32 = jax.block_until_ready(self_attention(
        x, wq, bq, wk, bk, wv, bv,
        compute_dtype=jnp.float32, qkv_dtype=jnp.float32))
    assert out32.shape == (B, S, H)
    assert jnp.allclose(out32, ref, atol=2e-3, rtol=2e-3), (
        f"f32 max abs err = {float(jnp.max(jnp.abs(out32 - ref)))}")

    # default bf16 MXU path (f32 accumulation, f32 softmax) -- the perf mode
    out16 = jax.block_until_ready(self_attention(x, wq, bq, wk, bk, wv, bv))
    assert out16.shape == (B, S, H)
    assert jnp.allclose(out16, ref, atol=1e-1, rtol=1e-1), (
        f"bf16 max abs err = {float(jnp.max(jnp.abs(out16 - ref)))}")

    # --- ragged check: S not a multiple of the tiles (padding + kv-mask path) ---
    Sr = 300
    xr = jax.random.normal(jax.random.PRNGKey(1), (B, Sr, H), dtype=jnp.float32)
    refr = reference(xr, wq, bq, wk, bk, wv, bv)
    outr = jax.block_until_ready(self_attention(xr, wq, bq, wk, bk, wv, bv))
    assert outr.shape == (B, Sr, H)
    assert jnp.allclose(outr, refr, atol=1e-1, rtol=1e-1), (
        f"ragged bf16 max abs err = {float(jnp.max(jnp.abs(outr - refr)))}")

    print("KERNEL_OK")
</pallas_src>

<mosaic_0001>
module attributes {stable_mosaic.version = 11 : i64} {
  func.func @_qkv_proj_kernel(%arg0: i32, %arg1: i32, %arg2: memref<1x256x256xf32, #tpu.memory_space<vmem>>, %arg3: memref<256x768xf32, #tpu.memory_space<vmem>>, %arg4: memref<1x768xf32, #tpu.memory_space<vmem>>, %arg5: memref<1x256x768xf32, #tpu.memory_space<vmem>>) attributes {dimension_semantics = [#tpu.dimension_semantics<parallel>, #tpu.dimension_semantics<parallel>], iteration_bounds = array<i64: 2, 1>, scalar_prefetch = 0 : i64, scratch_operands = 0 : i64, tpu.core_type = #tpu.core_type<tc>, window_params = [{transform_indices = @transform_0, window_bounds = array<i64: 1, 256, 256>}, {pipeline_mode = #tpu.pipeline_mode<synchronous>, transform_indices = @transform_1, window_bounds = array<i64: 256, 768>}, {pipeline_mode = #tpu.pipeline_mode<synchronous>, transform_indices = @transform_2, window_bounds = array<i64: 1, 768>}, {transform_indices = @transform_3, window_bounds = array<i64: 1, 256, 768>}]} {
    %c0 = arith.constant 0 : index
    %c0_0 = arith.constant 0 : index
    %c0_1 = arith.constant 0 : index
    %0 = vector.load %arg2[%c0, %c0_0, %c0_1] : memref<1x256x256xf32, #tpu.memory_space<vmem>>, vector<1x256x256xf32>
    %1 = vector.shape_cast %0 : vector<1x256x256xf32> to vector<256x256xf32>
    %c0_2 = arith.constant 0 : index
    %c0_3 = arith.constant 0 : index
    %2 = vector.load %arg3[%c0_2, %c0_3] : memref<256x768xf32, #tpu.memory_space<vmem>>, vector<256x768xf32>
    %cst = arith.constant dense<0.000000e+00> : vector<256x768xf32>
    %3 = tpu.matmul %1, %2, %cst {dimension_numbers = #tpu.dot_dimension_numbers<[1], [0], [0], [1], [0, 0, 1, 1], [], []>} : vector<256x256xf32>, vector<256x768xf32>, vector<256x768xf32> -> vector<256x768xf32>
    %c0_4 = arith.constant 0 : index
    %c0_5 = arith.constant 0 : index
    %4 = vector.load %arg4[%c0_4, %c0_5] : memref<1x768xf32, #tpu.memory_space<vmem>>, vector<1x768xf32>
    %5 = vector.broadcast %4 : vector<1x768xf32> to vector<256x768xf32>
    %6 = arith.addf %3, %5 : vector<256x768xf32>
    %c0_6 = arith.constant 0 : index
    %c0_7 = arith.constant 0 : index
    %c0_8 = arith.constant 0 : index
    %7 = vector.load %arg5[%c0_6, %c0_7, %c0_8] : memref<1x256x768xf32, #tpu.memory_space<vmem>>, vector<1x256x768xf32>
    %8 = vector.shape_cast %7 : vector<1x256x768xf32> to vector<256x768xf32>
    %9 = vector.shape_cast %6 : vector<256x768xf32> to vector<1x256x768xf32>
    tpu.vector_store %arg5[%c0_6, %c0_7, %c0_8], %9 {strides = array<i32>} : memref<1x256x768xf32, #tpu.memory_space<vmem>>, vector<1x256x768xf32>,
    return
  }
  func.func @transform_0(%arg0: i32, %arg1: i32) -> (i32, i32, i32) {
    %c0_i32 = arith.constant 0 : i32
    %c0_i32_0 = arith.constant 0 : i32
    return %arg0, %arg1, %c0_i32 : i32, i32, i32
  }
  func.func @transform_1(%arg0: i32, %arg1: i32) -> (i32, i32) {
    %c0_i32 = arith.constant 0 : i32
    %c0_i32_0 = arith.constant 0 : i32
    %c0_i32_1 = arith.constant 0 : i32
    return %c0_i32, %c0_i32_0 : i32, i32
  }
  func.func @transform_2(%arg0: i32, %arg1: i32) -> (i32, i32) {
    %c0_i32 = arith.constant 0 : i32
    %c0_i32_0 = arith.constant 0 : i32
    %c0_i32_1 = arith.constant 0 : i32
    return %c0_i32, %c0_i32_0 : i32, i32
  }
  func.func @transform_3(%arg0: i32, %arg1: i32) -> (i32, i32, i32) {
    %c0_i32 = arith.constant 0 : i32
    %c0_i32_0 = arith.constant 0 : i32
    return %arg0, %arg1, %c0_i32 : i32, i32, i32
  }
}

</mosaic_0001>

<llo_original>
// kernel: tpu_custom_call.1
$region0: #{tpu_custom_call.1}
  #allocation0 [shape = 'u32[]', space=smem, size = 0x4, offset = 0x4, fixed_abs, tag = 'smem constant byte address 0x4 - core index']
  #allocation1 [shape = 'u32[144,128]{1,0:T(1,128)}', space=vmem, size = 0x12000, scoped, tag = 'internal scratch']
  %s0 = inlined_call_operand.hbm [shape: f32[2,256,256], index: 0, kind: input, shape index: {}]
  %s1 = inlined_call_operand.hbm [shape: f32[256,768], index: 1, kind: input, shape index: {}]
  %s2 = inlined_call_operand.hbm [shape: f32[1,768], index: 2, kind: input, shape index: {}]
  %s3 = inlined_call_operand.hbm [shape: f32[2,256,768], index: 3, kind: output, shape index: {}]
  %s4 = sld [smem:[#allocation0]]
  $region57: #{tpu_custom_call.1} parent=0
    _
  %s6 = ssub.s32 1, %s4
  %s7 = scalar_select 0, %s6, %s4
  $region1: #{tpu_custom_call.1} parent=0
    #allocation2 [shape = 'u8[524288]{0}', space=vmem, size = 0x80000, scoped, tag = 'input window, operand 0']
    #allocation3 [shape = 's32[2]{0}', space=sflag, size = 0x8, scoped, tag = 'scoped memory for tpu_custom_call.1']
    #allocation4 [shape = 's32[2]{0}', space=sflag, size = 0x8, scoped, tag = 'scoped memory for tpu_custom_call.1']
    #allocation5 [shape = 'u8[786432]{0}', space=vmem, size = 0xc0000, scoped, tag = 'input window, operand 1, single buffered']
    #allocation6 [shape = 's32[1]{0}', space=sflag, size = 0x4, scoped, tag = 'scoped memory for tpu_custom_call.1']
    #allocation7 [shape = 'u8[3072]{0}', space=vmem, size = 0xc00, scoped, tag = 'input window, operand 2, single buffered']
    #allocation8 [shape = 'u8[1572864]{0}', space=vmem, size = 0x180000, scoped, tag = 'output window, operand 0']
    %8 = vsyncpa [#allocation3], 0
    %s9 = scalar_lea.sflag [#allocation3], 1
    %10 = vsyncpa %s9, 0
    %11 = vsyncpa [#allocation6], 0
    %12 = vsyncpa [#allocation4], 0
    %s13 = scalar_lea.sflag [#allocation4], 1
    %14 = vsyncpa %s13, 0
    loop: start=0, step=1, limit=4
    $region2: #{tpu_custom_call.1} parent=1 // loop_pre_header
      _
    $region3: #{tpu_custom_call.1} parent=1 // loop_header
      %s16 = sphi 0, %s20
      %p17 = scmp.ge.s32.totalorder %s16, 4
      %s23 = sphi 0, %s35
      %s24 = sphi 0, %s31
      %s25 = sphi 0, %s23
      %s26 = sphi 0, %s24
      %s27 = sphi 0, %s25
      %s28 = sphi 0, %s26
      %s40 = sphi 0, %s42
      %s43 = sphi 0, %s40
      %s44 = sphi 0, %s43
      %s60 = sphi 0, %s44
      %s64 = sphi 0, %s64
      %s66 = sphi 0, %s64
      %s67 = sphi 0, %s66
      %s81 = sphi 0, %s67
      %s85 = sphi 0, %s85
      %s87 = sphi 0, %s85
      %s88 = sphi 0, %s87
      %s102 = sphi 0, %s88
      %s110 = sphi 0, %s112
      %s113 = sphi 0, %s110
      %s114 = sphi 0, %s113
      %s130 = sphi 0, %s114
    $region4: #{tpu_custom_call.1} parent=1 // loop_header_branch
      %19 = sbr.rel (%p17) target = $region8
    $region5: #{tpu_custom_call.1} parent=1 // loop_body
      %s21 = ssub.s32 %s16, 1
      %s22 = ssub.s32 %s16, 2
      %s29 = sadd.s32 1, %s24
      %p30 = scmp.ge.s32.totalorder %s29, 1
      %s31 = scalar_select %p30, 0, %s29
      %s32 = sadd.s32 1, %s23
      %s33 = scalar_select %p30, %s32, %s23
      %p34 = scmp.ge.s32.totalorder %s33, 2
      %s35 = scalar_select %p34, 0, %s33
      %s36 = ssub.s32 %s23, %s35
      %s37 = ssub.s32 %s24, %s31
      %s38 = sor.u32 %s36, %s37
      %p39 = scmp.eq.s32.totalorder %s38, 0
      %s41 = sadd.s32 %s40, 1
      %s42 = scalar_select %p39, %s40, %s41
      %p45 = pneg %p39
      %p46 = scmp.eq.s32.totalorder %s16, 1
      %p47 = por %p45, %p46
      %p48 = scmp.ne.s32.totalorder %s40, %s43
      %p49 = scmp.eq.s32.totalorder %s16, 0
      %p50 = por %p48, %p49
      %p51 = scmp.ne.s32.totalorder %s40, %s43
      %p52 = scmp.eq.s32.totalorder %s21, 1
      %p53 = por %p51, %p52
      %p54 = scmp.ne.s32.totalorder %s43, %s44
      %p55 = scmp.eq.s32.totalorder %s21, 0
      %p56 = por %p54, %p55
      %p57 = scmp.ne.s32.totalorder %s43, %s44
      %p58 = scmp.eq.s32.totalorder %s22, 1
      %p59 = por %p57, %p58
      %p61 = scmp.ne.s32.totalorder %s44, %s60
      %p62 = scmp.eq.s32.totalorder %s22, 0
      %p63 = por %p61, %p62
      %s65 = sadd.s32 %s64, 1
      %p68 = scmp.eq.s32.totalorder %s16, 1
      %p69 = scmp.ne.s32.totalorder %s64, %s66
      %p70 = scmp.eq.s32.totalorder %s16, 0
      %p71 = por %p69, %p70
      %p72 = scmp.ne.s32.totalorder %s64, %s66
      %p73 = scmp.eq.s32.totalorder %s21, 1
      %p74 = por %p72, %p73
      %p75 = scmp.ne.s32.totalorder %s66, %s67
      %p76 = scmp.eq.s32.totalorder %s21, 0
      %p77 = por %p75, %p76
      %p78 = scmp.ne.s32.totalorder %s66, %s67
      %p79 = scmp.eq.s32.totalorder %s22, 1
      %p80 = por %p78, %p79
      %p82 = scmp.ne.s32.totalorder %s67, %s81
      %p83 = scmp.eq.s32.totalorder %s22, 0
      %p84 = por %p82, %p83
      %s86 = sadd.s32 %s85, 1
      %p89 = scmp.eq.s32.totalorder %s16, 1
      %p90 = scmp.ne.s32.totalorder %s85, %s87
      %p91 = scmp.eq.s32.totalorder %s16, 0
      %p92 = por %p90, %p91
      %p93 = scmp.ne.s32.totalorder %s85, %s87
      %p94 = scmp.eq.s32.totalorder %s21, 1
      %p95 = por %p93, %p94
      %p96 = scmp.ne.s32.totalorder %s87, %s88
      %p97 = scmp.eq.s32.totalorder %s21, 0
      %p98 = por %p96, %p97
      %p99 = scmp.ne.s32.totalorder %s87, %s88
      %p100 = scmp.eq.s32.totalorder %s22, 1
      %p101 = por %p99, %p100
      %p103 = scmp.ne.s32.totalorder %s88, %s102
      %p104 = scmp.eq.s32.totalorder %s22, 0
      %p105 = por %p103, %p104
      %s106 = ssub.s32 %s23, %s35
      %s107 = ssub.s32 %s24, %s31
      %s108 = sor.u32 %s106, %s107
      %p109 = scmp.eq.s32.totalorder %s108, 0
      %s111 = sadd.s32 %s110, 1
      %s112 = scalar_select %p109, %s110, %s111
      %p115 = pneg %p109
      %p116 = scmp.eq.s32.totalorder %s16, 1
      %p117 = por %p115, %p116
      %p118 = scmp.ne.s32.totalorder %s110, %s113
      %p119 = scmp.eq.s32.totalorder %s16, 0
      %p120 = por %p118, %p119
      %p121 = scmp.ne.s32.totalorder %s110, %s113
      %p122 = scmp.eq.s32.totalorder %s21, 1
      %p123 = por %p121, %p122
      %p124 = scmp.ne.s32.totalorder %s113, %s114
      %p125 = scmp.eq.s32.totalorder %s21, 0
      %p126 = por %p124, %p125
      %p127 = scmp.ne.s32.totalorder %s113, %s114
      %p128 = scmp.eq.s32.totalorder %s22, 1
      %p129 = por %p127, %p128
      %p131 = scmp.ne.s32.totalorder %s114, %s130
      %p132 = scmp.eq.s32.totalorder %s22, 0
      %p133 = por %p131, %p132
      %p134 = scmp.le.s32.totalorder 1, %s16
      %p135 = scmp.lt.s32.totalorder %s16, 3
      %p136 = pnand %p134, %p135
      %p137 = pneg %p136
      // Predicated region
      $region9: #{tpu_custom_call.1} parent=5 // pred_check
        _
      $region10: #{tpu_custom_call.1} parent=5 // pred_check_branch
        %139 = sbr.rel (%p136) target = $region12
      $region11: #{tpu_custom_call.1} parent=5 // pred_region
        %s140 = ssub.s32 %s16, 1
        // Predicated region
        $region13: #{tpu_custom_call.1} parent=11 // pred_check
          %p141 = pneg %p77
        $region14: #{tpu_custom_call.1} parent=11 // pred_check_branch
          %143 = sbr.rel (%p141) target = $region16
        $region15: #{tpu_custom_call.1} parent=11 // pred_region
          %s145 = ssub.s32 24576, 24576
          %146 = vsyncadd [#allocation6], %s145
          %s147 = sshll.u32 [#allocation5], 4
          %s148 = int_to_ptr.vmem [resolvable:$true] %s147
          %153 = dma.hbm_to_vmem [thread:$0]  %s1, 24576, %s148, [#allocation6], 768, 768, 48
        $region16: #{tpu_custom_call.1} parent=11 // pred_fallthru
          _
        // Predicated region
        $region17: #{tpu_custom_call.1} parent=11 // pred_check
          %p154 = pneg %p98
        $region18: #{tpu_custom_call.1} parent=11 // pred_check_branch
          %156 = sbr.rel (%p154) target = $region20
        $region19: #{tpu_custom_call.1} parent=11 // pred_region
          %s158 = ssub.s32 96, 96
          %159 = vsyncadd [#allocation6], %s158
          %s161 = sshll.u32 [#allocation7], 4
          %s162 = int_to_ptr.vmem [resolvable:$true] %s161
          %164 = dma.hbm_to_vmem [thread:$0]  %s2, 96, %s162, [#allocation6]
        $region20: #{tpu_custom_call.1} parent=11 // pred_fallthru
          _
      $region12: #{tpu_custom_call.1} parent=5 // pred_fallthru
        _
      %p165 = scmp.lt.s32.totalorder %s16, 2
      // Predicated region
      $region21: #{tpu_custom_call.1} parent=5 // pred_check
        %p166 = pneg %p165
      $region22: #{tpu_custom_call.1} parent=5 // pred_check_branch
        %168 = sbr.rel (%p166) target = $region24
      $region23: #{tpu_custom_call.1} parent=5 // pred_region
        // Predicated region
        $region25: #{tpu_custom_call.1} parent=23 // pred_check
          %p169 = pneg %p50
        $region26: #{tpu_custom_call.1} parent=23 // pred_check_branch
          %171 = sbr.rel (%p169) target = $region28
        $region27: #{tpu_custom_call.1} parent=23 // pred_region
          %s172 = sand.u32 %s40, 1
          %s173 = scalar_lea.sflag [#allocation3], %s172
          %s174 = sand.u32 %s40, 1
          %s175 = smul.addr %s174, 512
          %s176 = scalar_lea.vmem [#allocation2], %s175
          %s177 = smul.u32 32, %s24
          %s179 = ssub.s32 8192, 8192
          %180 = vsyncadd %s173, %s179
          %s181 = smul.addr %s177, 2
          %s182 = smul.addr %s23, 64
          %s183 = sadd.s32 %s181, %s182
          %s184 = smul.addr %s183, 128
          %s185 = scalar_lea.hbm %s0, %s184
          %s186 = sshll.u32 %s176, 4
          %s187 = int_to_ptr.vmem [resolvable:$true] %s186
          %192 = dma.hbm_to_vmem [thread:$0]  %s185, 8192, %s187, %s173, 256, 256, 16
        $region28: #{tpu_custom_call.1} parent=23 // pred_fallthru
          _
      $region24: #{tpu_custom_call.1} parent=5 // pred_fallthru
        _
      %p193 = scmp.le.s32.totalorder 1, %s16
      %p194 = scmp.lt.s32.totalorder %s16, 3
      %p195 = pnand %p193, %p194
      %p196 = pneg %p195
      // Predicated region
      $region29: #{tpu_custom_call.1} parent=5 // pred_check
        _
      $region30: #{tpu_custom_call.1} parent=5 // pred_check_branch
        %198 = sbr.rel (%p195) target = $region32
      $region31: #{tpu_custom_call.1} parent=5 // pred_region
        %s199 = ssub.s32 %s16, 1
        %s200 = sand.u32 %s43, 1
        %s201 = scalar_lea.sflag [#allocation3], %s200
        %s202 = sand.u32 %s43, 1
        %s203 = smul.addr %s202, 512
        %s204 = scalar_lea.vmem [#allocation2], %s203
        // Predicated region
        $region33: #{tpu_custom_call.1} parent=31 // pred_check
          %p205 = pneg %p56
        $region34: #{tpu_custom_call.1} parent=31 // pred_check_branch
          %207 = sbr.rel (%p205) target = $region36
        $region35: #{tpu_custom_call.1} parent=31 // pred_region
          %208 = dma.done %s201, 8192
        $region36: #{tpu_custom_call.1} parent=31 // pred_fallthru
          _
        // Predicated region
        $region37: #{tpu_custom_call.1} parent=31 // pred_check
          %p209 = pneg %p77
        $region38: #{tpu_custom_call.1} parent=31 // pred_check_branch
          %211 = sbr.rel (%p209) target = $region40
        $region39: #{tpu_custom_call.1} parent=31 // pred_region
          %212 = dma.done [#allocation6], 24576
        $region40: #{tpu_custom_call.1} parent=31 // pred_fallthru
          _
        // Predicated region
        $region41: #{tpu_custom_call.1} parent=31 // pred_check
          %p213 = pneg %p98
        $region42: #{tpu_custom_call.1} parent=31 // pred_check_branch
          %215 = sbr.rel (%p213) target = $region44
        $region43: #{tpu_custom_call.1} parent=31 // pred_region
          %216 = dma.done [#allocation6], 96
        $region44: #{tpu_custom_call.1} parent=31 // pred_fallthru
          _
        %s217 = sand.u32 %s43, 1
        %s218 = scalar_lea.sflag [#allocation3], %s217
        %s219 = sand.u32 %s43, 1
        %s220 = smul.addr %s219, 512
        %s221 = scalar_lea.vmem [#allocation2], %s220
        %p222 = pneg %p56
        %p223 = pneg %p53
        %p224 = pneg %p77
        %p225 = pneg %p74
        %p226 = pneg %p98
        %p227 = pneg %p95
        %p228 = pneg %p126
        %p229 = pneg %p123
        %s230 = sand.u32 %s113, 1
        %s231 = scalar_lea.sflag [#allocation4], %s230
        %s232 = sand.u32 %s113, 1
        %s233 = smul.addr %s232, 1536
        %s234 = scalar_lea.vmem [#allocation8], %s233
        %s235 = smul.u32 32, %s26
        %s236 = smul.u32 32, %s26
        %v237 = vld [vmem:[%s204] sm:$0xff]
        %v238 = vld [vmem:[%s204 + $0x8] sm:$0xff]
        %v239 = vld [vmem:[%s204 + $0x10] sm:$0xff]
        %v240 = vld [vmem:[%s204 + $0x18] sm:$0xff]
        %v241 = vld [vmem:[%s204 + $0x20] sm:$0xff]
        %v242 = vld [vmem:[%s204 + $0x28] sm:$0xff]
        %v243 = vld [vmem:[%s204 + $0x30] sm:$0xff]
        %v244 = vld [vmem:[%s204 + $0x38] sm:$0xff]
        %v245 = vld [vmem:[%s204 + $0x40] sm:$0xff]
        %v246 = vld [vmem:[%s204 + $0x48] sm:$0xff]
        %v247 = vld [vmem:[%s204 + $0x50] sm:$0xff]
        %v248 = vld [vmem:[%s204 + $0x58] sm:$0xff]
        %v249 = vld [vmem:[%s204 + $0x60] sm:$0xff]
        %v250 = vld [vmem:[%s204 + $0x68] sm:$0xff]
        %v251 = vld [vmem:[%s204 + $0x70] sm:$0xff]
        %v252 = vld [vmem:[%s204 + $0x78] sm:$0xff]
        %v253 = vld [vmem:[%s204 + $0x80] sm:$0xff]
        %v254 = vld [vmem:[%s204 + $0x88] sm:$0xff]
        %v255 = vld [vmem:[%s204 + $0x90] sm:$0xff]
        %v256 = vld [vmem:[%s204 + $0x98] sm:$0xff]
        %v257 = vld [vmem:[%s204 + $0xa0] sm:$0xff]
        %v258 = vld [vmem:[%s204 + $0xa8] sm:$0xff]
        %v259 = vld [vmem:[%s204 + $0xb0] sm:$0xff]
        %v260 = vld [vmem:[%s204 + $0xb8] sm:$0xff]
        %v261 = vld [vmem:[%s204 + $0xc0] sm:$0xff]
        %v262 = vld [vmem:[%s204 + $0xc8] sm:$0xff]
        %v263 = vld [vmem:[%s204 + $0xd0] sm:$0xff]
        %v264 = vld [vmem:[%s204 + $0xd8] sm:$0xff]
        %v265 = vld [vmem:[%s204 + $0xe0] sm:$0xff]
        %v266 = vld [vmem:[%s204 + $0xe8] sm:$0xff]
        %v267 = vld [vmem:[%s204 + $0xf0] sm:$0xff]
        %v268 = vld [vmem:[%s204 + $0xf8] sm:$0xff]
        %v269 = vld [vmem:[%s204 + $0x100] sm:$0xff]
        %v270 = vld [vmem:[%s204 + $0x108] sm:$0xff]
        %v271 = vld [vmem:[%s204 + $0x110] sm:$0xff]
        %v272 = vld [vmem:[%s204 + $0x118] sm:$0xff]
        %v273 = vld [vmem:[%s204 + $0x120] sm:$0xff]
        %v274 = vld [vmem:[%s204 + $0x128] sm:$0xff]
        %v275 = vld [vmem:[%s204 + $0x130] sm:$0xff]
        %v276 = vld [vmem:[%s204 + $0x138] sm:$0xff]
        %v277 = vld [vmem:[%s204 + $0x140] sm:$0xff]
        %v278 = vld [vmem:[%s204 + $0x148] sm:$0xff]
        %v279 = vld [vmem:[%s204 + $0x150] sm:$0xff]
        %v280 = vld [vmem:[%s204 + $0x158] sm:$0xff]
        %v281 = vld [vmem:[%s204 + $0x160] sm:$0xff]
        %v282 = vld [vmem:[%s204 + $0x168] sm:$0xff]
        %v283 = vld [vmem:[%s204 + $0x170] sm:$0xff]
        %v284 = vld [vmem:[%s204 + $0x178] sm:$0xff]
        %v285 = vld [vmem:[%s204 + $0x180] sm:$0xff]
        %v286 = vld [vmem:[%s204 + $0x188] sm:$0xff]
        %v287 = vld [vmem:[%s204 + $0x190] sm:$0xff]
        %v288 = vld [vmem:[%s204 + $0x198] sm:$0xff]
        %v289 = vld [vmem:[%s204 + $0x1a0] sm:$0xff]
        %v290 = vld [vmem:[%s204 + $0x1a8] sm:$0xff]
        %v291 = vld [vmem:[%s204 + $0x1b0] sm:$0xff]
        %v292 = vld [vmem:[%s204 + $0x1b8] sm:$0xff]
        %v293 = vld [vmem:[%s204 + $0x1c0] sm:$0xff]
        %v294 = vld [vmem:[%s204 + $0x1c8] sm:$0xff]
        %v295 = vld [vmem:[%s204 + $0x1d0] sm:$0xff]
        %v296 = vld [vmem:[%s204 + $0x1d8] sm:$0xff]
        %v297 = vld [vmem:[%s204 + $0x1e0] sm:$0xff]
        %v298 = vld [vmem:[%s204 + $0x1e8] sm:$0xff]
        %v299 = vld [vmem:[%s204 + $0x1f0] sm:$0xff]
        %v300 = vld [vmem:[%s204 + $0x1f8] sm:$0xff]
        %v301 = vld [vmem:[#allocation5] sm:$0xff]
        %v302 = vld [vmem:[#allocation5 + $0x8] sm:$0xff]
        %v303 = vld [vmem:[#allocation5 + $0x10] sm:$0xff]
        %v304 = vld [vmem:[#allocation5 + $0x18] sm:$0xff]
        %v305 = vld [vmem:[#allocation5 + $0x20] sm:$0xff]
        %v306 = vld [vmem:[#allocation5 + $0x28] sm:$0xff]
        %v307 = vld [vmem:[#allocation5 + $0x30] sm:$0xff]
        %v308 = vld [vmem:[#allocation5 + $0x38] sm:$0xff]
        %v309 = vld [vmem:[#allocation5 + $0x40] sm:$0xff]
        %v310 = vld [vmem:[#allocation5 + $0x48] sm:$0xff]
        %v311 = vld [vmem:[#allocation5 + $0x50] sm:$0xff]
        %v312 = vld [vmem:[#allocation5 + $0x58] sm:$0xff]
        %v313 = vld [vmem:[#allocation5 + $0x60] sm:$0xff]
        %v314 = vld [vmem:[#allocation5 + $0x68] sm:$0xff]
        %v315 = vld [vmem:[#allocation5 + $0x70] sm:$0xff]
        %v316 = vld [vmem:[#allocation5 + $0x78] sm:$0xff]
        %v317 = vld [vmem:[#allocation5 + $0x80] sm:$0xff]
        %v318 = vld [vmem:[#allocation5 + $0x88] sm:$0xff]
        %v319 = vld [vmem:[#allocation5 + $0x90] sm:$0xff]
        %v320 = vld [vmem:[#allocation5 + $0x98] sm:$0xff]
        %v321 = vld [vmem:[#allocation5 + $0xa0] sm:$0xff]
        %v322 = vld [vmem:[#allocation5 + $0xa8] sm:$0xff]
        %v323 = vld [vmem:[#allocation5 + $0xb0] sm:$0xff]
        %v324 = vld [vmem:[#allocation5 + $0xb8] sm:$0xff]
        %v325 = vld [vmem:[#allocation5 + $0xc0] sm:$0xff]
        %v326 = vld [vmem:[#allocation5 + $0xc8] sm:$0xff]
        %v327 = vld [vmem:[#allocation5 + $0xd0] sm:$0xff]
        %v328 = vld [vmem:[#allocation5 + $0xd8] sm:$0xff]
        %v329 = vld [vmem:[#allocation5 + $0xe0] sm:$0xff]
        %v330 = vld [vmem:[#allocation5 + $0xe8] sm:$0xff]
        %v331 = vld [vmem:[#allocation5 + $0xf0] sm:$0xff]
        %v332 = vld [vmem:[#allocation5 + $0xf8] sm:$0xff]
        %v333 = vld [vmem:[#allocation5 + $0x100] sm:$0xff]
        %v334 = vld [vmem:[#allocation5 + $0x108] sm:$0xff]
        %v335 = vld [vmem:[#allocation5 + $0x110] sm:$0xff]
        %v336 = vld [vmem:[#allocation5 + $0x118] sm:$0xff]
        %v337 = vld [vmem:[#allocation5 + $0x120] sm:$0xff]
        %v338 = vld [vmem:[#allocation5 + $0x128] sm:$0xff]
        %v339 = vld [vmem:[#allocation5 + $0x130] sm:$0xff]
        %v340 = vld [vmem:[#allocation5 + $0x138] sm:$0xff]
        %v341 = vld [vmem:[#allocation5 + $0x140] sm:$0xff]
        %v342 = vld [vmem:[#allocation5 + $0x148] sm:$0xff]
        %v343 = vld [vmem:[#allocation5 + $0x150] sm:$0xff]
        %v344 = vld [vmem:[#allocation5 + $0x158] sm:$0xff]
        %v345 = vld [vmem:[#allocation5 + $0x160] sm:$0xff]
        %v346 = vld [vmem:[#allocation5 + $0x168] sm:$0xff]
        %v347 = vld [vmem:[#allocation5 + $0x170] sm:$0xff]
        %v348 = vld [vmem:[#allocation5 + $0x178] sm:$0xff]
        %v349 = vld [vmem:[#allocation5 + $0x180] sm:$0xff]
        %v350 = vld [vmem:[#allocation5 + $0x188] sm:$0xff]
        %v351 = vld [vmem:[#allocation5 + $0x190] sm:$0xff]
        %v352 = vld [vmem:[#allocation5 + $0x198] sm:$0xff]
        %v353 = vld [vmem:[#allocation5 + $0x1a0] sm:$0xff]
        %v354 = vld [vmem:[#allocation5 + $0x1a8] sm:$0xff]
        %v355 = vld [vmem:[#allocation5 + $0x1b0] sm:$0xff]
        %v356 = vld [vmem:[#allocation5 + $0x1b8] sm:$0xff]
        %v357 = vld [vmem:[#allocation5 + $0x1c0] sm:$0xff]
        %v358 = vld [vmem:[#allocation5 + $0x1c8] sm:$0xff]
        %v359 = vld [vmem:[#allocation5 + $0x1d0] sm:$0xff]
        %v360 = vld [vmem:[#allocation5 + $0x1d8] sm:$0xff]
        %v361 = vld [vmem:[#allocation5 + $0x1e0] sm:$0xff]
        %v362 = vld [vmem:[#allocation5 + $0x1e8] sm:$0xff]
        %v363 = vld [vmem:[#allocation5 + $0x1f0] sm:$0xff]
        %v364 = vld [vmem:[#allocation5 + $0x1f8] sm:$0xff]
        %v365 = vld [vmem:[#allocation5 + $0x200] sm:$0xff]
        %v366 = vld [vmem:[#allocation5 + $0x208] sm:$0xff]
        %v367 = vld [vmem:[#allocation5 + $0x210] sm:$0xff]
        %v368 = vld [vmem:[#allocation5 + $0x218] sm:$0xff]
        %v369 = vld [vmem:[#allocation5 + $0x220] sm:$0xff]
        %v370 = vld [vmem:[#allocation5 + $0x228] sm:$0xff]
        %v371 = vld [vmem:[#allocation5 + $0x230] sm:$0xff]
        %v372 = vld [vmem:[#allocation5 + $0x238] sm:$0xff]
        %v373 = vld [vmem:[#allocation5 + $0x240] sm:$0xff]
        %v374 = vld [vmem:[#allocation5 + $0x248] sm:$0xff]
        %v375 = vld [vmem:[#allocation5 + $0x250] sm:$0xff]
        %v376 = vld [vmem:[#allocation5 + $0x258] sm:$0xff]
        %v377 = vld [vmem:[#allocation5 + $0x260] sm:$0xff]
        %v378 = vld [vmem:[#allocation5 + $0x268] sm:$0xff]
        %v379 = vld [vmem:[#allocation5 + $0x270] sm:$0xff]
        %v380 = vld [vmem:[#allocation5 + $0x278] sm:$0xff]
        %v381 = vld [vmem:[#allocation5 + $0x280] sm:$0xff]
        %v382 = vld [vmem:[#allocation5 + $0x288] sm:$0xff]
        %v383 = vld [vmem:[#allocation5 + $0x290] sm:$0xff]
        %v384 = vld [vmem:[#allocation5 + $0x298] sm:$0xff]
        %v385 = vld [vmem:[#allocation5 + $0x2a0] sm:$0xff]
        %v386 = vld [vmem:[#allocation5 + $0x2a8] sm:$0xff]
        %v387 = vld [vmem:[#allocation5 + $0x2b0] sm:$0xff]
        %v388 = vld [vmem:[#allocation5 + $0x2b8] sm:$0xff]
        %v389 = vld [vmem:[#allocation5 + $0x2c0] sm:$0xff]
        %v390 = vld [vmem:[#allocation5 + $0x2c8] sm:$0xff]
        %v391 = vld [vmem:[#allocation5 + $0x2d0] sm:$0xff]
        %v392 = vld [vmem:[#allocation5 + $0x2d8] sm:$0xff]
        %v393 = vld [vmem:[#allocation5 + $0x2e0] sm:$0xff]
        %v394 = vld [vmem:[#allocation5 + $0x2e8] sm:$0xff]
        %v395 = vld [vmem:[#allocation5 + $0x2f0] sm:$0xff]
        %v396 = vld [vmem:[#allocation5 + $0x2f8] sm:$0xff]
        %v397 = vld [vmem:[#allocation5 + $0x300] sm:$0xff]
        %v398 = vld [vmem:[#allocation5 + $0x308] sm:$0xff]
        %v399 = vld [vmem:[#allocation5 + $0x310] sm:$0xff]
        %v400 = vld [vmem:[#allocation5 + $0x318] sm:$0xff]
        %v401 = vld [vmem:[#allocation5 + $0x320] sm:$0xff]
        %v402 = vld [vmem:[#allocation5 + $0x328] sm:$0xff]
        %v403 = vld [vmem:[#allocation5 + $0x330] sm:$0xff]
        %v404 = vld [vmem:[#allocation5 + $0x338] sm:$0xff]
        %v405 = vld [vmem:[#allocation5 + $0x340] sm:$0xff]
        %v406 = vld [vmem:[#allocation5 + $0x348] sm:$0xff]
        %v407 = vld [vmem:[#allocation5 + $0x350] sm:$0xff]
        %v408 = vld [vmem:[#allocation5 + $0x358] sm:$0xff]
        %v409 = vld [vmem:[#allocation5 + $0x360] sm:$0xff]
        %v410 = vld [vmem:[#allocation5 + $0x368] sm:$0xff]
        %v411 = vld [vmem:[#allocation5 + $0x370] sm:$0xff]
        %v412 = vld [vmem:[#allocation5 + $0x378] sm:$0xff]
        %v413 = vld [vmem:[#allocation5 + $0x380] sm:$0xff]
        %v414 = vld [vmem:[#allocation5 + $0x388] sm:$0xff]
        %v415 = vld [vmem:[#allocation5 + $0x390] sm:$0xff]
        %v416 = vld [vmem:[#allocation5 + $0x398] sm:$0xff]
        %v417 = vld [vmem:[#allocation5 + $0x3a0] sm:$0xff]
        %v418 = vld [vmem:[#allocation5 + $0x3a8] sm:$0xff]
        %v419 = vld [vmem:[#allocation5 + $0x3b0] sm:$0xff]
        %v420 = vld [vmem:[#allocation5 + $0x3b8] sm:$0xff]
        %v421 = vld [vmem:[#allocation5 + $0x3c0] sm:$0xff]
        %v422 = vld [vmem:[#allocation5 + $0x3c8] sm:$0xff]
        %v423 = vld [vmem:[#allocation5 + $0x3d0] sm:$0xff]
        %v424 = vld [vmem:[#allocation5 + $0x3d8] sm:$0xff]
        %v425 = vld [vmem:[#allocation5 + $0x3e0] sm:$0xff]
        %v426 = vld [vmem:[#allocation5 + $0x3e8] sm:$0xff]
        %v427 = vld [vmem:[#allocation5 + $0x3f0] sm:$0xff]
        %v428 = vld [vmem:[#allocation5 + $0x3f8] sm:$0xff]
        %v429 = vld [vmem:[#allocation5 + $0x400] sm:$0xff]
        %v430 = vld [vmem:[#allocation5 + $0x408] sm:$0xff]
        %v431 = vld [vmem:[#allocation5 + $0x410] sm:$0xff]
        %v432 = vld [vmem:[#allocation5 + $0x418] sm:$0xff]
        %v433 = vld [vmem:[#allocation5 + $0x420] sm:$0xff]
        %v434 = vld [vmem:[#allocation5 + $0x428] sm:$0xff]
        %v435 = vld [vmem:[#allocation5 + $0x430] sm:$0xff]
        %v436 = vld [vmem:[#allocation5 + $0x438] sm:$0xff]
        %v437 = vld [vmem:[#allocation5 + $0x440] sm:$0xff]
        %v438 = vld [vmem:[#allocation5 + $0x448] sm:$0xff]
        %v439 = vld [vmem:[#allocation5 + $0x450] sm:$0xff]
        %v440 = vld [vmem:[#allocation5 + $0x458] sm:$0xff]
        %v441 = vld [vmem:[#allocation5 + $0x460] sm:$0xff]
        %v442 = vld [vmem:[#allocation5 + $0x468] sm:$0xff]
        %v443 = vld [vmem:[#allocation5 + $0x470] sm:$0xff]
        %v444 = vld [vmem:[#allocation5 + $0x478] sm:$0xff]
        %v445 = vld [vmem:[#allocation5 + $0x480] sm:$0xff]
        %v446 = vld [vmem:[#allocation5 + $0x488] sm:$0xff]
        %v447 = vld [vmem:[#allocation5 + $0x490] sm:$0xff]
        %v448 = vld [vmem:[#allocation5 + $0x498] sm:$0xff]
        %v449 = vld [vmem:[#allocation5 + $0x4a0] sm:$0xff]
        %v450 = vld [vmem:[#allocation5 + $0x4a8] sm:$0xff]
        %v451 = vld [vmem:[#allocation5 + $0x4b0] sm:$0xff]
        %v452 = vld [vmem:[#allocation5 + $0x4b8] sm:$0xff]
        %v453 = vld [vmem:[#allocation5 + $0x4c0] sm:$0xff]
        %v454 = vld [vmem:[#allocation5 + $0x4c8] sm:$0xff]
        %v455 = vld [vmem:[#allocation5 + $0x4d0] sm:$0xff]
        %v456 = vld [vmem:[#allocation5 + $0x4d8] sm:$0xff]
        %v457 = vld [vmem:[#allocation5 + $0x4e0] sm:$0xff]
        %v458 = vld [vmem:[#allocation5 + $0x4e8] sm:$0xff]
        %v459 = vld [vmem:[#allocation5 + $0x4f0] sm:$0xff]
        %v460 = vld [vmem:[#allocation5 + $0x4f8] sm:$0xff]
        %v461 = vld [vmem:[#allocation5 + $0x500] sm:$0xff]
        %v462 = vld [vmem:[#allocation5 + $0x508] sm:$0xff]
        %v463 = vld [vmem:[#allocation5 + $0x510] sm:$0xff]
        %v464 = vld [vmem:[#allocation5 + $0x518] sm:$0xff]
        %v465 = vld [vmem:[#allocation5 + $0x520] sm:$0xff]
        %v466 = vld [vmem:[#allocation5 + $0x528] sm:$0xff]
        %v467 = vld [vmem:[#allocation5 + $0x530] sm:$0xff]
        %v468 = vld [vmem:[#allocation5 + $0x538] sm:$0xff]
        %v469 = vld [vmem:[#allocation5 + $0x540] sm:$0xff]
        %v470 = vld [vmem:[#allocation5 + $0x548] sm:$0xff]
        %v471 = vld [vmem:[#allocation5 + $0x550] sm:$0xff]
        %v472 = vld [vmem:[#allocation5 + $0x558] sm:$0xff]
        %v473 = vld [vmem:[#allocation5 + $0x560] sm:$0xff]
        %v474 = vld [vmem:[#allocation5 + $0x568] sm:$0xff]
        %v475 = vld [vmem:[#allocation5 + $0x570] sm:$0xff]
        %v476 = vld [vmem:[#allocation5 + $0x578] sm:$0xff]
        %v477 = vld [vmem:[#allocation5 + $0x580] sm:$0xff]
        %v478 = vld [vmem:[#allocation5 + $0x588] sm:$0xff]
        %v479 = vld [vmem:[#allocation5 + $0x590] sm:$0xff]
        %v480 = vld [vmem:[#allocation5 + $0x598] sm:$0xff]
        %v481 = vld [vmem:[#allocation5 + $0x5a0] sm:$0xff]
        %v482 = vld [vmem:[#allocation5 + $0x5a8] sm:$0xff]
        %v483 = vld [vmem:[#allocation5 + $0x5b0] sm:$0xff]
        %v484 = vld [vmem:[#allocation5 + $0x5b8] sm:$0xff]
        %v485 = vld [vmem:[#allocation5 + $0x5c0] sm:$0xff]
        %v486 = vld [vmem:[#allocation5 + $0x5c8] sm:$0xff]
        %v487 = vld [vmem:[#allocation5 + $0x5d0] sm:$0xff]
        %v488 = vld [vmem:[#allocation5 + $0x5d8] sm:$0xff]
        %v489 = vld [vmem:[#allocation5 + $0x5e0] sm:$0xff]
        %v490 = vld [vmem:[#allocation5 + $0x5e8] sm:$0xff]
        %v491 = vld [vmem:[#allocation5 + $0x5f0] sm:$0xff]
        %v492 = vld [vmem:[#allocation5 + $0x5f8] sm:$0xff]
        %v493 = vld [vmem:[#allocation7] sm:$0x3f]
        %v495 = vlaneseq
        %v496 = vshrl.u32 %v495, 7
        %v497 = vsub.s32 0, %v496
        %v498 = vrot.slane %v493, %v497
        %v499 = vlaneseq
        %v500 = vshrl.u32 %v499, 7
        %v501 = vsub.s32 1, %v500
        %v502 = vrot.slane %v493, %v501
        %v503 = vlaneseq
        %v504 = vshrl.u32 %v503, 7
        %v505 = vsub.s32 2, %v504
        %v506 = vrot.slane %v493, %v505
        %v507 = vlaneseq
        %v508 = vshrl.u32 %v507, 7
        %v509 = vsub.s32 3, %v508
        %v510 = vrot.slane %v493, %v509
        %v511 = vlaneseq
        %v512 = vshrl.u32 %v511, 7
        %v513 = vsub.s32 4, %v512
        %v514 = vrot.slane %v493, %v513
        %v515 = vlaneseq
        %v516 = vshrl.u32 %v515, 7
        %v517 = vsub.s32 5, %v516
        %v518 = vrot.slane %v493, %v517
        %525 = vmatprep.subr.mxu0 %v392
        %526 = vmatpush1.msra.mxu0 %v391
        %527 = vmatprep.subr.mxu0 %v386
        %528 = vmatpush1.msra.mxu0 %v385
        %529 = vmatprep.subr.mxu0 %v380
        %530 = vmatpush1.msra.mxu0 %v379
        %531 = vmatprep.subr.mxu0 %v374
        %532 = vmatpush1.msra.mxu0 %v373
        %533 = vmatprep.subr.mxu0 %v368
        %534 = vmatpush1.msra.mxu0 %v367
        %535 = vmatprep.subr.mxu0 %v362
        %536 = vmatpush1.msra.mxu0 %v361
        %537 = vmatprep.subr.mxu0 %v356
        %538 = vmatpush1.msra.mxu0 %v355
        %539 = vmatprep.subr.mxu0 %v350
        %540 = vmatpush1.msra.mxu0 %v349
        %541 = vmatprep.subr.mxu0 %v344
        %542 = vmatpush1.msra.mxu0 %v343
        %543 = vmatprep.subr.mxu0 %v338
        %544 = vmatpush1.msra.mxu0 %v337
        %545 = vmatprep.subr.mxu0 %v332
        %546 = vmatpush1.msra.mxu0 %v331
        %547 = vmatprep.subr.mxu0 %v326
        %548 = vmatpush1.msra.mxu0 %v325
        %549 = vmatprep.subr.mxu0 %v320
        %550 = vmatpush1.msra.mxu0 %v319
        %551 = vmatprep.subr.mxu0 %v314
        %552 = vmatpush1.msra.mxu0 %v313
        %553 = vmatprep.subr.mxu0 %v308
        %554 = vmatpush1.msra.mxu0 %v307
        %555 = vmatprep.subr.mxu0 %v302
        %556 = vmatpush1.msra.mxu0 %v301
        %557 = vmatprep.subr.mxu0 %v488
        %558 = vmatpush2.msra.mxu0 %v487
        %559 = vmatprep.subr.mxu0 %v482
        %560 = vmatpush2.msra.mxu0 %v481
        %561 = vmatprep.subr.mxu0 %v476
        %562 = vmatpush2.msra.mxu0 %v475
        %563 = vmatprep.subr.mxu0 %v470
        %564 = vmatpush2.msra.mxu0 %v469
        %565 = vmatprep.subr.mxu0 %v464
        %566 = vmatpush2.msra.mxu0 %v463
        %567 = vmatprep.subr.mxu0 %v458
        %568 = vmatpush2.msra.mxu0 %v457
        %569 = vmatprep.subr.mxu0 %v452
        %570 = vmatpush2.msra.mxu0 %v451
        %571 = vmatprep.subr.mxu0 %v446
        %572 = vmatpush2.msra.mxu0 %v445
        %573 = vmatprep.subr.mxu0 %v440
        %574 = vmatpush2.msra.mxu0 %v439
        %575 = vmatprep.subr.mxu0 %v434
        %576 = vmatpush2.msra.mxu0 %v433
        %577 = vmatprep.subr.mxu0 %v428
        %578 = vmatpush2.msra.mxu0 %v427
        %579 = vmatprep.subr.mxu0 %v422
        %580 = vmatpush2.msra.mxu0 %v421
        %581 = vmatprep.subr.mxu0 %v416
        %582 = vmatpush2.msra.mxu0 %v415
        %583 = vmatprep.subr.mxu0 %v410
        %584 = vmatpush2.msra.mxu0 %v409
        %585 = vmatprep.subr.mxu0 %v404
        %586 = vmatpush2.msra.mxu0 %v403
        %587 = vmatprep.subr.mxu0 %v398
        %588 = vmatpush2.msra.mxu0 %v397
        %589 = vmatprep.mubr.f32.mxu0 %v238
        %590 = vmatmul.mubr.f32.gmra.mxu0 %v237
        %v591 = vpop.f32.mrf.mxu0
        %v592 = vadd.f32 %v498, %v591
        %v593 = vpop.f32.mrf.mxu0
        %v594 = vadd.f32 %v502, %v593
        %595 = vmatprep.mubr.f32.mxu0 %v240
        %596 = vmatmul.mubr.f32.gmra.mxu0 %v239
        %v597 = vpop.f32.mrf.mxu0
        %v598 = vadd.f32 %v498, %v597
        %v599 = vpop.f32.mrf.mxu0
        %v600 = vadd.f32 %v502, %v599
        %601 = vmatprep.mubr.f32.mxu0 %v242
        %602 = vmatmul.mubr.f32.gmra.mxu0 %v241
        %v603 = vpop.f32.mrf.mxu0
        %v604 = vadd.f32 %v498, %v603
        %v605 = vpop.f32.mrf.mxu0
        %v606 = vadd.f32 %v502, %v605
        %607 = vmatprep.mubr.f32.mxu0 %v244
        %608 = vmatmul.mubr.f32.gmra.mxu0 %v243
        %v609 = vpop.f32.mrf.mxu0
        %v610 = vadd.f32 %v498, %v609
        %v611 = vpop.f32.mrf.mxu0
        %v612 = vadd.f32 %v502, %v611
        %613 = vmatprep.mubr.f32.mxu0 %v246
        %614 = vmatmul.mubr.f32.gmra.mxu0 %v245
        %v615 = vpop.f32.mrf.mxu0
        %v616 = vadd.f32 %v498, %v615
        %v617 = vpop.f32.mrf.mxu0
        %v618 = vadd.f32 %v502, %v617
        %619 = vmatprep.mubr.f32.mxu0 %v248
        %620 = vmatmul.mubr.f32.gmra.mxu0 %v247
        %v621 = vpop.f32.mrf.mxu0
        %v622 = vadd.f32 %v498, %v621
        %v623 = vpop.f32.mrf.mxu0
        %v624 = vadd.f32 %v502, %v623
        %625 = vmatprep.mubr.f32.mxu0 %v250
        %626 = vmatmul.mubr.f32.gmra.mxu0 %v249
        %v627 = vpop.f32.mrf.mxu0
        %v628 = vadd.f32 %v498, %v627
        %v629 = vpop.f32.mrf.mxu0
        %v630 = vadd.f32 %v502, %v629
        %631 = vmatprep.mubr.f32.mxu0 %v252
        %632 = vmatmul.mubr.f32.gmra.mxu0 %v251
        %v633 = vpop.f32.mrf.mxu0
        %v634 = vadd.f32 %v498, %v633
        %v635 = vpop.f32.mrf.mxu0
        %v636 = vadd.f32 %v502, %v635
        %637 = vmatprep.mubr.f32.mxu0 %v254
        %638 = vmatmul.mubr.f32.gmra.mxu0 %v253
        %v639 = vpop.f32.mrf.mxu0
        %v640 = vadd.f32 %v498, %v639
        %v641 = vpop.f32.mrf.mxu0
        %v642 = vadd.f32 %v502, %v641
        %643 = vmatprep.mubr.f32.mxu0 %v256
        %644 = vmatmul.mubr.f32.gmra.mxu0 %v255
        %v645 = vpop.f32.mrf.mxu0
        %v646 = vadd.f32 %v498, %v645
        %v647 = vpop.f32.mrf.mxu0
        %v648 = vadd.f32 %v502, %v647
        %649 = vmatprep.mubr.f32.mxu0 %v258
        %650 = vmatmul.mubr.f32.gmra.mxu0 %v257
        %v651 = vpop.f32.mrf.mxu0
        %v652 = vadd.f32 %v498, %v651
        %v653 = vpop.f32.mrf.mxu0
        %v654 = vadd.f32 %v502, %v653
        %655 = vmatprep.mubr.f32.mxu0 %v260
        %656 = vmatmul.mubr.f32.gmra.mxu0 %v259
        %v657 = vpop.f32.mrf.mxu0
        %v658 = vadd.f32 %v498, %v657
        %v659 = vpop.f32.mrf.mxu0
        %v660 = vadd.f32 %v502, %v659
        %661 = vmatprep.mubr.f32.mxu0 %v262
        %662 = vmatmul.mubr.f32.gmra.mxu0 %v261
        %v663 = vpop.f32.mrf.mxu0
        %v664 = vadd.f32 %v498, %v663
        %v665 = vpop.f32.mrf.mxu0
        %v666 = vadd.f32 %v502, %v665
        %667 = vmatprep.mubr.f32.mxu0 %v264
        %668 = vmatmul.mubr.f32.gmra.mxu0 %v263
        %v669 = vpop.f32.mrf.mxu0
        %v670 = vadd.f32 %v498, %v669
        %v671 = vpop.f32.mrf.mxu0
        %v672 = vadd.f32 %v502, %v671
        %673 = vmatprep.mubr.f32.mxu0 %v266
        %674 = vmatmul.mubr.f32.gmra.mxu0 %v265
        %v675 = vpop.f32.mrf.mxu0
        %v676 = vadd.f32 %v498, %v675
        %v677 = vpop.f32.mrf.mxu0
        %v678 = vadd.f32 %v502, %v677
        %679 = vmatprep.mubr.f32.mxu0 %v268
        %680 = vmatmul.mubr.f32.gmra.mxu0 %v267
        %v681 = vpop.f32.mrf.mxu0
        %v682 = vadd.f32 %v498, %v681
        %v683 = vpop.f32.mrf.mxu0
        %v684 = vadd.f32 %v502, %v683
        %685 = vmatprep.mubr.f32.mxu0 %v270
        %686 = vmatmul.mubr.f32.gmra.mxu0 %v269
        %v687 = vpop.f32.mrf.mxu0
        %v688 = vadd.f32 %v498, %v687
        %v689 = vpop.f32.mrf.mxu0
        %v690 = vadd.f32 %v502, %v689
        %691 = vmatprep.mubr.f32.mxu0 %v272
        %692 = vmatmul.mubr.f32.gmra.mxu0 %v271
        %v693 = vpop.f32.mrf.mxu0
        %v694 = vadd.f32 %v498, %v693
        %v695 = vpop.f32.mrf.mxu0
        %v696 = vadd.f32 %v502, %v695
        %697 = vmatprep.mubr.f32.mxu0 %v274
        %698 = vmatmul.mubr.f32.gmra.mxu0 %v273
        %v699 = vpop.f32.mrf.mxu0
        %v700 = vadd.f32 %v498, %v699
        %v701 = vpop.f32.mrf.mxu0
        %v702 = vadd.f32 %v502, %v701
        %703 = vmatprep.mubr.f32.mxu0 %v276
        %704 = vmatmul.mubr.f32.gmra.mxu0 %v275
        %v705 = vpop.f32.mrf.mxu0
        %v706 = vadd.f32 %v498, %v705
        %v707 = vpop.f32.mrf.mxu0
        %v708 = vadd.f32 %v502, %v707
        %709 = vmatprep.mubr.f32.mxu0 %v278
        %710 = vmatmul.mubr.f32.gmra.mxu0 %v277
        %v711 = vpop.f32.mrf.mxu0
        %v712 = vadd.f32 %v498, %v711
        %v713 = vpop.f32.mrf.mxu0
        %v714 = vadd.f32 %v502, %v713
        %715 = vmatprep.mubr.f32.mxu0 %v280
        %716 = vmatmul.mubr.f32.gmra.mxu0 %v279
        %v717 = vpop.f32.mrf.mxu0
        %v718 = vadd.f32 %v498, %v717
        %v719 = vpop.f32.mrf.mxu0
        %v720 = vadd.f32 %v502, %v719
        %721 = vmatprep.mubr.f32.mxu0 %v282
        %722 = vmatmul.mubr.f32.gmra.mxu0 %v281
        %v723 = vpop.f32.mrf.mxu0
        %v724 = vadd.f32 %v498, %v723
        %v725 = vpop.f32.mrf.mxu0
        %v726 = vadd.f32 %v502, %v725
        %727 = vmatprep.mubr.f32.mxu0 %v284
        %728 = vmatmul.mubr.f32.gmra.mxu0 %v283
        %v729 = vpop.f32.mrf.mxu0
        %v730 = vadd.f32 %v498, %v729
        %v731 = vpop.f32.mrf.mxu0
        %v732 = vadd.f32 %v502, %v731
        %733 = vmatprep.mubr.f32.mxu0 %v286
        %734 = vmatmul.mubr.f32.gmra.mxu0 %v285
        %v735 = vpop.f32.mrf.mxu0
        %v736 = vadd.f32 %v498, %v735
        %v737 = vpop.f32.mrf.mxu0
        %v738 = vadd.f32 %v502, %v737
        %739 = vmatprep.mubr.f32.mxu0 %v288
        %740 = vmatmul.mubr.f32.gmra.mxu0 %v287
        %v741 = vpop.f32.mrf.mxu0
        %v742 = vadd.f32 %v498, %v741
        %v743 = vpop.f32.mrf.mxu0
        %v744 = vadd.f32 %v502, %v743
        %745 = vmatprep.mubr.f32.mxu0 %v290
        %746 = vmatmul.mubr.f32.gmra.mxu0 %v289
        %v747 = vpop.f32.mrf.mxu0
        %v748 = vadd.f32 %v498, %v747
        %v749 = vpop.f32.mrf.mxu0
        %v750 = vadd.f32 %v502, %v749
        %751 = vmatprep.mubr.f32.mxu0 %v292
        %752 = vmatmul.mubr.f32.gmra.mxu0 %v291
        %v753 = vpop.f32.mrf.mxu0
        %v754 = vadd.f32 %v498, %v753
        %v755 = vpop.f32.mrf.mxu0
        %v756 = vadd.f32 %v502, %v755
        %757 = vmatprep.mubr.f32.mxu0 %v294
        %758 = vmatmul.mubr.f32.gmra.mxu0 %v293
        %v759 = vpop.f32.mrf.mxu0
        %v760 = vadd.f32 %v498, %v759
        %v761 = vpop.f32.mrf.mxu0
        %v762 = vadd.f32 %v502, %v761
        %763 = vmatprep.mubr.f32.mxu0 %v296
        %764 = vmatmul.mubr.f32.gmra.mxu0 %v295
        %v765 = vpop.f32.mrf.mxu0
        %v766 = vadd.f32 %v498, %v765
        %v767 = vpop.f32.mrf.mxu0
        %v768 = vadd.f32 %v502, %v767
        %769 = vmatprep.mubr.f32.mxu0 %v298
        %770 = vmatmul.mubr.f32.gmra.mxu0 %v297
        %v771 = vpop.f32.mrf.mxu0
        %v772 = vadd.f32 %v498, %v771
        %v773 = vpop.f32.mrf.mxu0
        %v774 = vadd.f32 %v502, %v773
        %775 = vmatprep.mubr.f32.mxu0 %v300
        %776 = vmatmul.mubr.f32.gmra.mxu0 %v299
        %v777 = vpop.f32.mrf.mxu0
        %v778 = vadd.f32 %v498, %v777
        %v779 = vpop.f32.mrf.mxu0
        %v780 = vadd.f32 %v502, %v779
        %781 = vdwg.mxu0
        %782 = vmatprep.subr.mxu0 %v394
        %783 = vmatpush1.msra.mxu0 %v393
        %784 = vmatprep.subr.mxu0 %v388
        %785 = vmatpush1.msra.mxu0 %v387
        %786 = vmatprep.subr.mxu0 %v382
        %787 = vmatpush1.msra.mxu0 %v381
        %788 = vmatprep.subr.mxu0 %v376
        %789 = vmatpush1.msra.mxu0 %v375
        %790 = vmatprep.subr.mxu0 %v370
        %791 = vmatpush1.msra.mxu0 %v369
        %792 = vmatprep.subr.mxu0 %v364
        %793 = vmatpush1.msra.mxu0 %v363
        %794 = vmatprep.subr.mxu0 %v358
        %795 = vmatpush1.msra.mxu0 %v357
        %796 = vmatprep.subr.mxu0 %v352
        %797 = vmatpush1.msra.mxu0 %v351
        %798 = vmatprep.subr.mxu0 %v346
        %799 = vmatpush1.msra.mxu0 %v345
        %800 = vmatprep.subr.mxu0 %v340
        %801 = vmatpush1.msra.mxu0 %v339
        %802 = vmatprep.subr.mxu0 %v334
        %803 = vmatpush1.msra.mxu0 %v333
        %804 = vmatprep.subr.mxu0 %v328
        %805 = vmatpush1.msra.mxu0 %v327
        %806 = vmatprep.subr.mxu0 %v322
        %807 = vmatpush1.msra.mxu0 %v321
        %808 = vmatprep.subr.mxu0 %v316
        %809 = vmatpush1.msra.mxu0 %v315
        %810 = vmatprep.subr.mxu0 %v310
        %811 = vmatpush1.msra.mxu0 %v309
        %812 = vmatprep.subr.mxu0 %v304
        %813 = vmatpush1.msra.mxu0 %v303
        %814 = vmatprep.subr.mxu0 %v490
        %815 = vmatpush2.msra.mxu0 %v489
        %816 = vmatprep.subr.mxu0 %v484
        %817 = vmatpush2.msra.mxu0 %v483
        %818 = vmatprep.subr.mxu0 %v478
        %819 = vmatpush2.msra.mxu0 %v477
        %820 = vmatprep.subr.mxu0 %v472
        %821 = vmatpush2.msra.mxu0 %v471
        %822 = vmatprep.subr.mxu0 %v466
        %823 = vmatpush2.msra.mxu0 %v465
        %824 = vmatprep.subr.mxu0 %v460
        %825 = vmatpush2.msra.mxu0 %v459
        %826 = vmatprep.subr.mxu0 %v454
        %827 = vmatpush2.msra.mxu0 %v453
        %828 = vmatprep.subr.mxu0 %v448
        %829 = vmatpush2.msra.mxu0 %v447
        %830 = vmatprep.subr.mxu0 %v442
        %831 = vmatpush2.msra.mxu0 %v441
        %832 = vmatprep.subr.mxu0 %v436
        %833 = vmatpush2.msra.mxu0 %v435
        %834 = vmatprep.subr.mxu0 %v430
        %835 = vmatpush2.msra.mxu0 %v429
        %836 = vmatprep.subr.mxu0 %v424
        %837 = vmatpush2.msra.mxu0 %v423
        %838 = vmatprep.subr.mxu0 %v418
        %839 = vmatpush2.msra.mxu0 %v417
        %840 = vmatprep.subr.mxu0 %v412
        %841 = vmatpush2.msra.mxu0 %v411
        %842 = vmatprep.subr.mxu0 %v406
        %843 = vmatpush2.msra.mxu0 %v405
        %844 = vmatprep.subr.mxu0 %v400
        %845 = vmatpush2.msra.mxu0 %v399
        %846 = vmatprep.mubr.f32.mxu0 %v238
        %847 = vmatmul.mubr.f32.gmra.mxu0 %v237
        %v848 = vpop.f32.mrf.mxu0
        %v849 = vadd.f32 %v506, %v848
        %v850 = vpop.f32.mrf.mxu0
        %v851 = vadd.f32 %v510, %v850
        %852 = vmatprep.mubr.f32.mxu0 %v240
        %853 = vmatmul.mubr.f32.gmra.mxu0 %v239
        %v854 = vpop.f32.mrf.mxu0
        %v855 = vadd.f32 %v506, %v854
        %v856 = vpop.f32.mrf.mxu0
        %v857 = vadd.f32 %v510, %v856
        %858 = vmatprep.mubr.f32.mxu0 %v242
        %859 = vmatmul.mubr.f32.gmra.mxu0 %v241
        %v860 = vpop.f32.mrf.mxu0
        %v861 = vadd.f32 %v506, %v860
        %v862 = vpop.f32.mrf.mxu0
        %v863 = vadd.f32 %v510, %v862
        %864 = vmatprep.mubr.f32.mxu0 %v244
        %865 = vmatmul.mubr.f32.gmra.mxu0 %v243
        %v866 = vpop.f32.mrf.mxu0
        %v867 = vadd.f32 %v506, %v866
        %v868 = vpop.f32.mrf.mxu0
        %v869 = vadd.f32 %v510, %v868
        %870 = vmatprep.mubr.f32.mxu0 %v246
        %871 = vmatmul.mubr.f32.gmra.mxu0 %v245
        %v872 = vpop.f32.mrf.mxu0
        %v873 = vadd.f32 %v506, %v872
        %v874 = vpop.f32.mrf.mxu0
        %v875 = vadd.f32 %v510, %v874
        %876 = vmatprep.mubr.f32.mxu0 %v248
        %877 = vmatmul.mubr.f32.gmra.mxu0 %v247
        %v878 = vpop.f32.mrf.mxu0
        %v879 = vadd.f32 %v506, %v878
        %v880 = vpop.f32.mrf.mxu0
        %v881 = vadd.f32 %v510, %v880
        %882 = vmatprep.mubr.f32.mxu0 %v250
        %883 = vmatmul.mubr.f32.gmra.mxu0 %v249
        %v884 = vpop.f32.mrf.mxu0
        %v885 = vadd.f32 %v506, %v884
        %v886 = vpop.f32.mrf.mxu0
        %v887 = vadd.f32 %v510, %v886
        %888 = vmatprep.mubr.f32.mxu0 %v252
        %889 = vmatmul.mubr.f32.gmra.mxu0 %v251
        %v890 = vpop.f32.mrf.mxu0
        %v891 = vadd.f32 %v506, %v890
        %v892 = vpop.f32.mrf.mxu0
        %v893 = vadd.f32 %v510, %v892
        %894 = vmatprep.mubr.f32.mxu0 %v254
        %895 = vmatmul.mubr.f32.gmra.mxu0 %v253
        %v896 = vpop.f32.mrf.mxu0
        %v897 = vadd.f32 %v506, %v896
        %v898 = vpop.f32.mrf.mxu0
        %v899 = vadd.f32 %v510, %v898
        %900 = vmatprep.mubr.f32.mxu0 %v256
        %901 = vmatmul.mubr.f32.gmra.mxu0 %v255
        %v902 = vpop.f32.mrf.mxu0
        %v903 = vadd.f32 %v506, %v902
        %v904 = vpop.f32.mrf.mxu0
        %v905 = vadd.f32 %v510, %v904
        %906 = vmatprep.mubr.f32.mxu0 %v258
        %907 = vmatmul.mubr.f32.gmra.mxu0 %v257
        %v908 = vpop.f32.mrf.mxu0
        %v909 = vadd.f32 %v506, %v908
        %v910 = vpop.f32.mrf.mxu0
        %v911 = vadd.f32 %v510, %v910
        %912 = vmatprep.mubr.f32.mxu0 %v260
        %913 = vmatmul.mubr.f32.gmra.mxu0 %v259
        %v914 = vpop.f32.mrf.mxu0
        %v915 = vadd.f32 %v506, %v914
        %v916 = vpop.f32.mrf.mxu0
        %v917 = vadd.f32 %v510, %v916
        %918 = vmatprep.mubr.f32.mxu0 %v262
        %919 = vmatmul.mubr.f32.gmra.mxu0 %v261
        %v920 = vpop.f32.mrf.mxu0
        %v921 = vadd.f32 %v506, %v920
        %v922 = vpop.f32.mrf.mxu0
        %v923 = vadd.f32 %v510, %v922
        %924 = vmatprep.mubr.f32.mxu0 %v264
        %925 = vmatmul.mubr.f32.gmra.mxu0 %v263
        %v926 = vpop.f32.mrf.mxu0
        %v927 = vadd.f32 %v506, %v926
        %v928 = vpop.f32.mrf.mxu0
        %v929 = vadd.f32 %v510, %v928
        %930 = vmatprep.mubr.f32.mxu0 %v266
        %931 = vmatmul.mubr.f32.gmra.mxu0 %v265
        %v932 = vpop.f32.mrf.mxu0
        %v933 = vadd.f32 %v506, %v932
        %v934 = vpop.f32.mrf.mxu0
        %v935 = vadd.f32 %v510, %v934
        %936 = vmatprep.mubr.f32.mxu0 %v268
        %937 = vmatmul.mubr.f32.gmra.mxu0 %v267
        %v938 = vpop.f32.mrf.mxu0
        %v939 = vadd.f32 %v506, %v938
        %v940 = vpop.f32.mrf.mxu0
        %v941 = vadd.f32 %v510, %v940
        %942 = vmatprep.mubr.f32.mxu0 %v270
        %943 = vmatmul.mubr.f32.gmra.mxu0 %v269
        %v944 = vpop.f32.mrf.mxu0
        %v945 = vadd.f32 %v506, %v944
        %v946 = vpop.f32.mrf.mxu0
        %v947 = vadd.f32 %v510, %v946
        %948 = vmatprep.mubr.f32.mxu0 %v272
        %949 = vmatmul.mubr.f32.gmra.mxu0 %v271
        %v950 = vpop.f32.mrf.mxu0
        %v951 = vadd.f32 %v506, %v950
        %v952 = vpop.f32.mrf.mxu0
        %v953 = vadd.f32 %v510, %v952
        %954 = vmatprep.mubr.f32.mxu0 %v274
        %955 = vmatmul.mubr.f32.gmra.mxu0 %v273
        %v956 = vpop.f32.mrf.mxu0
        %v957 = vadd.f32 %v506, %v956
        %v958 = vpop.f32.mrf.mxu0
        %v959 = vadd.f32 %v510, %v958
        %960 = vmatprep.mubr.f32.mxu0 %v276
        %961 = vmatmul.mubr.f32.gmra.mxu0 %v275
        %v962 = vpop.f32.mrf.mxu0
        %v963 = vadd.f32 %v506, %v962
        %v964 = vpop.f32.mrf.mxu0
        %v965 = vadd.f32 %v510, %v964
        %966 = vmatprep.mubr.f32.mxu0 %v278
        %967 = vmatmul.mubr.f32.gmra.mxu0 %v277
        %v968 = vpop.f32.mrf.mxu0
        %v969 = vadd.f32 %v506, %v968
        %v970 = vpop.f32.mrf.mxu0
        %v971 = vadd.f32 %v510, %v970
        %972 = vmatprep.mubr.f32.mxu0 %v280
        %973 = vmatmul.mubr.f32.gmra.mxu0 %v279
        %v974 = vpop.f32.mrf.mxu0
        %v975 = vadd.f32 %v506, %v974
        %v976 = vpop.f32.mrf.mxu0
        %v977 = vadd.f32 %v510, %v976
        %978 = vmatprep.mubr.f32.mxu0 %v282
        %979 = vmatmul.mubr.f32.gmra.mxu0 %v281
        %v980 = vpop.f32.mrf.mxu0
        %v981 = vadd.f32 %v506, %v980
        %v982 = vpop.f32.mrf.mxu0
        %v983 = vadd.f32 %v510, %v982
        %984 = vmatprep.mubr.f32.mxu0 %v284
        %985 = vmatmul.mubr.f32.gmra.mxu0 %v283
        %v986 = vpop.f32.mrf.mxu0
        %v987 = vadd.f32 %v506, %v986
        %v988 = vpop.f32.mrf.mxu0
        %v989 = vadd.f32 %v510, %v988
        %990 = vmatprep.mubr.f32.mxu0 %v286
        %991 = vmatmul.mubr.f32.gmra.mxu0 %v285
        %v992 = vpop.f32.mrf.mxu0
        %v993 = vadd.f32 %v506, %v992
        %v994 = vpop.f32.mrf.mxu0
        %v995 = vadd.f32 %v510, %v994
        %996 = vmatprep.mubr.f32.mxu0 %v288
        %997 = vmatmul.mubr.f32.gmra.mxu0 %v287
        %v998 = vpop.f32.mrf.mxu0
        %v999 = vadd.f32 %v506, %v998
        %v1000 = vpop.f32.mrf.mxu0
        %v1001 = vadd.f32 %v510, %v1000
        %1002 = vmatprep.mubr.f32.mxu0 %v290
        %1003 = vmatmul.mubr.f32.gmra.mxu0 %v289
        %v1004 = vpop.f32.mrf.mxu0
        %v1005 = vadd.f32 %v506, %v1004
        %v1006 = vpop.f32.mrf.mxu0
        %v1007 = vadd.f32 %v510, %v1006
        %1008 = vmatprep.mubr.f32.mxu0 %v292
        %1009 = vmatmul.mubr.f32.gmra.mxu0 %v291
        %v1010 = vpop.f32.mrf.mxu0
        %v1011 = vadd.f32 %v506, %v1010
        %v1012 = vpop.f32.mrf.mxu0
        %v1013 = vadd.f32 %v510, %v1012
        %1014 = vmatprep.mubr.f32.mxu0 %v294
        %1015 = vmatmul.mubr.f32.gmra.mxu0 %v293
        %v1016 = vpop.f32.mrf.mxu0
        %v1017 = vadd.f32 %v506, %v1016
        %v1018 = vpop.f32.mrf.mxu0
        %v1019 = vadd.f32 %v510, %v1018
        %1020 = vmatprep.mubr.f32.mxu0 %v296
        %1021 = vmatmul.mubr.f32.gmra.mxu0 %v295
        %v1022 = vpop.f32.mrf.mxu0
        %v1023 = vadd.f32 %v506, %v1022
        %v1024 = vpop.f32.mrf.mxu0
        %v1025 = vadd.f32 %v510, %v1024
        %1026 = vmatprep.mubr.f32.mxu0 %v298
        %1027 = vmatmul.mubr.f32.gmra.mxu0 %v297
        %v1028 = vpop.f32.mrf.mxu0
        %v1029 = vadd.f32 %v506, %v1028
        %v1030 = vpop.f32.mrf.mxu0
        %v1031 = vadd.f32 %v510, %v1030
        %1032 = vmatprep.mubr.f32.mxu0 %v300
        %1033 = vmatmul.mubr.f32.gmra.mxu0 %v299
        %v1034 = vpop.f32.mrf.mxu0
        %v1035 = vadd.f32 %v506, %v1034
        %v1036 = vpop.f32.mrf.mxu0
        %v1037 = vadd.f32 %v510, %v1036
        %1038 = vdwg.mxu0
        %1039 = vmatprep.subr.mxu0 %v396
        %1040 = vmatpush1.msra.mxu0 %v395
        %1041 = vmatprep.subr.mxu0 %v390
        %1042 = vmatpush1.msra.mxu0 %v389
        %1043 = vmatprep.subr.mxu0 %v384
        %1044 = vmatpush1.msra.mxu0 %v383
        %1045 = vmatprep.subr.mxu0 %v378
        %1046 = vmatpush1.msra.mxu0 %v377
        %1047 = vmatprep.subr.mxu0 %v372
        %1048 = vmatpush1.msra.mxu0 %v371
        %1049 = vmatprep.subr.mxu0 %v366
        %1050 = vmatpush1.msra.mxu0 %v365
        %1051 = vmatprep.subr.mxu0 %v360
        %1052 = vmatpush1.msra.mxu0 %v359
        %1053 = vmatprep.subr.mxu0 %v354
        %1054 = vmatpush1.msra.mxu0 %v353
        %1055 = vmatprep.subr.mxu0 %v348
        %1056 = vmatpush1.msra.mxu0 %v347
        %1057 = vmatprep.subr.mxu0 %v342
        %1058 = vmatpush1.msra.mxu0 %v341
        %1059 = vmatprep.subr.mxu0 %v336
        %1060 = vmatpush1.msra.mxu0 %v335
        %1061 = vmatprep.subr.mxu0 %v330
        %1062 = vmatpush1.msra.mxu0 %v329
        %1063 = vmatprep.subr.mxu0 %v324
        %1064 = vmatpush1.msra.mxu0 %v323
        %1065 = vmatprep.subr.mxu0 %v318
        %1066 = vmatpush1.msra.mxu0 %v317
        %1067 = vmatprep.subr.mxu0 %v312
        %1068 = vmatpush1.msra.mxu0 %v311
        %1069 = vmatprep.subr.mxu0 %v306
        %1070 = vmatpush1.msra.mxu0 %v305
        %1071 = vmatprep.subr.mxu0 %v492
        %1072 = vmatpush2.msra.mxu0 %v491
        %1073 = vmatprep.subr.mxu0 %v486
        %1074 = vmatpush2.msra.mxu0 %v485
        %1075 = vmatprep.subr.mxu0 %v480
        %1076 = vmatpush2.msra.mxu0 %v479
        %1077 = vmatprep.subr.mxu0 %v474
        %1078 = vmatpush2.msra.mxu0 %v473
        %1079 = vmatprep.subr.mxu0 %v468
        %1080 = vmatpush2.msra.mxu0 %v467
        %1081 = vmatprep.subr.mxu0 %v462
        %1082 = vmatpush2.msra.mxu0 %v461
        %1083 = vmatprep.subr.mxu0 %v456
        %1084 = vmatpush2.msra.mxu0 %v455
        %1085 = vmatprep.subr.mxu0 %v450
        %1086 = vmatpush2.msra.mxu0 %v449
        %1087 = vmatprep.subr.mxu0 %v444
        %1088 = vmatpush2.msra.mxu0 %v443
        %1089 = vmatprep.subr.mxu0 %v438
        %1090 = vmatpush2.msra.mxu0 %v437
        %1091 = vmatprep.subr.mxu0 %v432
        %1092 = vmatpush2.msra.mxu0 %v431
        %1093 = vmatprep.subr.mxu0 %v426
        %1094 = vmatpush2.msra.mxu0 %v425
        %1095 = vmatprep.subr.mxu0 %v420
        %1096 = vmatpush2.msra.mxu0 %v419
        %1097 = vmatprep.subr.mxu0 %v414
        %1098 = vmatpush2.msra.mxu0 %v413
        %1099 = vmatprep.subr.mxu0 %v408
        %1100 = vmatpush2.msra.mxu0 %v407
        %1101 = vmatprep.subr.mxu0 %v402
        %1102 = vmatpush2.msra.mxu0 %v401
        %1103 = vmatprep.mubr.f32.mxu0 %v238
        %1104 = vmatmul.mubr.f32.gmra.mxu0 %v237
        %v1105 = vpop.f32.mrf.mxu0
        %v1106 = vadd.f32 %v514, %v1105
        %v1107 = vpop.f32.mrf.mxu0
        %v1108 = vadd.f32 %v518, %v1107
        %1109 = vmatprep.mubr.f32.mxu0 %v240
        %1110 = vmatmul.mubr.f32.gmra.mxu0 %v239
        %v1111 = vpop.f32.mrf.mxu0
        %v1112 = vadd.f32 %v514, %v1111
        %v1113 = vpop.f32.mrf.mxu0
        %v1114 = vadd.f32 %v518, %v1113
        %1115 = vmatprep.mubr.f32.mxu0 %v242
        %1116 = vmatmul.mubr.f32.gmra.mxu0 %v241
        %v1117 = vpop.f32.mrf.mxu0
        %v1118 = vadd.f32 %v514, %v1117
        %v1119 = vpop.f32.mrf.mxu0
        %v1120 = vadd.f32 %v518, %v1119
        %1121 = vmatprep.mubr.f32.mxu0 %v244
        %1122 = vmatmul.mubr.f32.gmra.mxu0 %v243
        %v1123 = vpop.f32.mrf.mxu0
        %v1124 = vadd.f32 %v514, %v1123
        %v1125 = vpop.f32.mrf.mxu0
        %v1126 = vadd.f32 %v518, %v1125
        %1127 = vmatprep.mubr.f32.mxu0 %v246
        %1128 = vmatmul.mubr.f32.gmra.mxu0 %v245
        %v1129 = vpop.f32.mrf.mxu0
        %v1130 = vadd.f32 %v514, %v1129
        %v1131 = vpop.f32.mrf.mxu0
        %v1132 = vadd.f32 %v518, %v1131
        %1133 = vmatprep.mubr.f32.mxu0 %v248
        %1134 = vmatmul.mubr.f32.gmra.mxu0 %v247
        %v1135 = vpop.f32.mrf.mxu0
        %v1136 = vadd.f32 %v514, %v1135
        %v1137 = vpop.f32.mrf.mxu0
        %v1138 = vadd.f32 %v518, %v1137
        %1139 = vmatprep.mubr.f32.mxu0 %v250
        %1140 = vmatmul.mubr.f32.gmra.mxu0 %v249
        %v1141 = vpop.f32.mrf.mxu0
        %v1142 = vadd.f32 %v514, %v1141
        %v1143 = vpop.f32.mrf.mxu0
        %v1144 = vadd.f32 %v518, %v1143
        %1145 = vmatprep.mubr.f32.mxu0 %v252
        %1146 = vmatmul.mubr.f32.gmra.mxu0 %v251
        %v1147 = vpop.f32.mrf.mxu0
        %v1148 = vadd.f32 %v514, %v1147
        %v1149 = vpop.f32.mrf.mxu0
        %v1150 = vadd.f32 %v518, %v1149
        %1151 = vmatprep.mubr.f32.mxu0 %v254
        %1152 = vmatmul.mubr.f32.gmra.mxu0 %v253
        %v1153 = vpop.f32.mrf.mxu0
        %v1154 = vadd.f32 %v514, %v1153
        %v1155 = vpop.f32.mrf.mxu0
        %v1156 = vadd.f32 %v518, %v1155
        %1157 = vmatprep.mubr.f32.mxu0 %v256
        %1158 = vmatmul.mubr.f32.gmra.mxu0 %v255
        %v1159 = vpop.f32.mrf.mxu0
        %v1160 = vadd.f32 %v514, %v1159
        %v1161 = vpop.f32.mrf.mxu0
        %v1162 = vadd.f32 %v518, %v1161
        %1163 = vmatprep.mubr.f32.mxu0 %v258
        %1164 = vmatmul.mubr.f32.gmra.mxu0 %v257
        %v1165 = vpop.f32.mrf.mxu0
        %v1166 = vadd.f32 %v514, %v1165
        %v1167 = vpop.f32.mrf.mxu0
        %v1168 = vadd.f32 %v518, %v1167
        %1169 = vmatprep.mubr.f32.mxu0 %v260
        %1170 = vmatmul.mubr.f32.gmra.mxu0 %v259
        %v1171 = vpop.f32.mrf.mxu0
        %v1172 = vadd.f32 %v514, %v1171
        %v1173 = vpop.f32.mrf.mxu0
        %v1174 = vadd.f32 %v518, %v1173
        %1175 = vmatprep.mubr.f32.mxu0 %v262
        %1176 = vmatmul.mubr.f32.gmra.mxu0 %v261
        %v1177 = vpop.f32.mrf.mxu0
        %v1178 = vadd.f32 %v514, %v1177
        %v1179 = vpop.f32.mrf.mxu0
        %v1180 = vadd.f32 %v518, %v1179
        %1181 = vmatprep.mubr.f32.mxu0 %v264
        %1182 = vmatmul.mubr.f32.gmra.mxu0 %v263
        %v1183 = vpop.f32.mrf.mxu0
        %v1184 = vadd.f32 %v514, %v1183
        %v1185 = vpop.f32.mrf.mxu0
        %v1186 = vadd.f32 %v518, %v1185
        %1187 = vmatprep.mubr.f32.mxu0 %v266
        %1188 = vmatmul.mubr.f32.gmra.mxu0 %v265
        %v1189 = vpop.f32.mrf.mxu0
        %v1190 = vadd.f32 %v514, %v1189
        %v1191 = vpop.f32.mrf.mxu0
        %v1192 = vadd.f32 %v518, %v1191
        %1193 = vmatprep.mubr.f32.mxu0 %v268
        %1194 = vmatmul.mubr.f32.gmra.mxu0 %v267
        %v1195 = vpop.f32.mrf.mxu0
        %v1196 = vadd.f32 %v514, %v1195
        %v1197 = vpop.f32.mrf.mxu0
        %v1198 = vadd.f32 %v518, %v1197
        %1199 = vmatprep.mubr.f32.mxu0 %v270
        %1200 = vmatmul.mubr.f32.gmra.mxu0 %v269
        %v1201 = vpop.f32.mrf.mxu0
        %v1202 = vadd.f32 %v514, %v1201
        %v1203 = vpop.f32.mrf.mxu0
        %v1204 = vadd.f32 %v518, %v1203
        %1205 = vmatprep.mubr.f32.mxu0 %v272
        %1206 = vmatmul.mubr.f32.gmra.mxu0 %v271
        %v1207 = vpop.f32.mrf.mxu0
        %v1208 = vadd.f32 %v514, %v1207
        %v1209 = vpop.f32.mrf.mxu0
        %v1210 = vadd.f32 %v518, %v1209
        %1211 = vmatprep.mubr.f32.mxu0 %v274
        %1212 = vmatmul.mubr.f32.gmra.mxu0 %v273
        %v1213 = vpop.f32.mrf.mxu0
        %v1214 = vadd.f32 %v514, %v1213
        %v1215 = vpop.f32.mrf.mxu0
        %v1216 = vadd.f32 %v518, %v1215
        %1217 = vmatprep.mubr.f32.mxu0 %v276
        %1218 = vmatmul.mubr.f32.gmra.mxu0 %v275
        %v1219 = vpop.f32.mrf.mxu0
        %v1220 = vadd.f32 %v514, %v1219
        %v1221 = vpop.f32.mrf.mxu0
        %v1222 = vadd.f32 %v518, %v1221
        %1223 = vmatprep.mubr.f32.mxu0 %v278
        %1224 = vmatmul.mubr.f32.gmra.mxu0 %v277
        %v1225 = vpop.f32.mrf.mxu0
        %v1226 = vadd.f32 %v514, %v1225
        %v1227 = vpop.f32.mrf.mxu0
        %v1228 = vadd.f32 %v518, %v1227
        %1229 = vmatprep.mubr.f32.mxu0 %v280
        %1230 = vmatmul.mubr.f32.gmra.mxu0 %v279
        %v1231 = vpop.f32.mrf.mxu0
        %v1232 = vadd.f32 %v514, %v1231
        %v1233 = vpop.f32.mrf.mxu0
        %v1234 = vadd.f32 %v518, %v1233
        %1235 = vmatprep.mubr.f32.mxu0 %v282
        %1236 = vmatmul.mubr.f32.gmra.mxu0 %v281
        %v1237 = vpop.f32.mrf.mxu0
        %v1238 = vadd.f32 %v514, %v1237
        %v1239 = vpop.f32.mrf.mxu0
        %v1240 = vadd.f32 %v518, %v1239
        %1241 = vmatprep.mubr.f32.mxu0 %v284
        %1242 = vmatmul.mubr.f32.gmra.mxu0 %v283
        %v1243 = vpop.f32.mrf.mxu0
        %v1244 = vadd.f32 %v514, %v1243
        %v1245 = vpop.f32.mrf.mxu0
        %v1246 = vadd.f32 %v518, %v1245
        %1247 = vmatprep.mubr.f32.mxu0 %v286
        %1248 = vmatmul.mubr.f32.gmra.mxu0 %v285
        %v1249 = vpop.f32.mrf.mxu0
        %v1250 = vadd.f32 %v514, %v1249
        %v1251 = vpop.f32.mrf.mxu0
        %v1252 = vadd.f32 %v518, %v1251
        %1253 = vmatprep.mubr.f32.mxu0 %v288
        %1254 = vmatmul.mubr.f32.gmra.mxu0 %v287
        %v1255 = vpop.f32.mrf.mxu0
        %v1256 = vadd.f32 %v514, %v1255
        %v1257 = vpop.f32.mrf.mxu0
        %v1258 = vadd.f32 %v518, %v1257
        %1259 = vmatprep.mubr.f32.mxu0 %v290
        %1260 = vmatmul.mubr.f32.gmra.mxu0 %v289
        %v1261 = vpop.f32.mrf.mxu0
        %v1262 = vadd.f32 %v514, %v1261
        %v1263 = vpop.f32.mrf.mxu0
        %v1264 = vadd.f32 %v518, %v1263
        %1265 = vmatprep.mubr.f32.mxu0 %v292
        %1266 = vmatmul.mubr.f32.gmra.mxu0 %v291
        %v1267 = vpop.f32.mrf.mxu0
        %v1268 = vadd.f32 %v514, %v1267
        %v1269 = vpop.f32.mrf.mxu0
        %v1270 = vadd.f32 %v518, %v1269
        %1271 = vmatprep.mubr.f32.mxu0 %v294
        %1272 = vmatmul.mubr.f32.gmra.mxu0 %v293
        %v1273 = vpop.f32.mrf.mxu0
        %v1274 = vadd.f32 %v514, %v1273
        %v1275 = vpop.f32.mrf.mxu0
        %v1276 = vadd.f32 %v518, %v1275
        %1277 = vmatprep.mubr.f32.mxu0 %v296
        %1278 = vmatmul.mubr.f32.gmra.mxu0 %v295
        %v1279 = vpop.f32.mrf.mxu0
        %v1280 = vadd.f32 %v514, %v1279
        %v1281 = vpop.f32.mrf.mxu0
        %v1282 = vadd.f32 %v518, %v1281
        %1283 = vmatprep.mubr.f32.mxu0 %v298
        %1284 = vmatmul.mubr.f32.gmra.mxu0 %v297
        %v1285 = vpop.f32.mrf.mxu0
        %v1286 = vadd.f32 %v514, %v1285
        %v1287 = vpop.f32.mrf.mxu0
        %v1288 = vadd.f32 %v518, %v1287
        %1289 = vmatprep.mubr.f32.mxu0 %v300
        %1290 = vmatmul.mubr.f32.gmra.mxu0 %v299
        %v1291 = vpop.f32.mrf.mxu0
        %v1292 = vadd.f32 %v514, %v1291
        %v1293 = vpop.f32.mrf.mxu0
        %v1294 = vadd.f32 %v518, %v1293
        %1295 = vdwg.mxu0
        %1296 = vst [vmem:[%s234] sm:$0xff] %v592
        %1297 = vst [vmem:[%s234 + $0x8] sm:$0xff] %v594
        %1298 = vst [vmem:[%s234 + $0x10] sm:$0xff] %v849
        %1299 = vst [vmem:[%s234 + $0x18] sm:$0xff] %v851
        %1300 = vst [vmem:[%s234 + $0x20] sm:$0xff] %v1106
        %1301 = vst [vmem:[%s234 + $0x28] sm:$0xff] %v1108
        %1302 = vst [vmem:[%s234 + $0x30] sm:$0xff] %v598
        %1303 = vst [vmem:[%s234 + $0x38] sm:$0xff] %v600
        %1304 = vst [vmem:[%s234 + $0x40] sm:$0xff] %v855
        %1305 = vst [vmem:[%s234 + $0x48] sm:$0xff] %v857
        %1306 = vst [vmem:[%s234 + $0x50] sm:$0xff] %v1112
        %1307 = vst [vmem:[%s234 + $0x58] sm:$0xff] %v1114
        %1308 = vst [vmem:[%s234 + $0x60] sm:$0xff] %v604
        %1309 = vst [vmem:[%s234 + $0x68] sm:$0xff] %v606
        %1310 = vst [vmem:[%s234 + $0x70] sm:$0xff] %v861
        %1311 = vst [vmem:[%s234 + $0x78] sm:$0xff] %v863
        %1312 = vst [vmem:[%s234 + $0x80] sm:$0xff] %v1118
        %1313 = vst [vmem:[%s234 + $0x88] sm:$0xff] %v1120
        %1314 = vst [vmem:[%s234 + $0x90] sm:$0xff] %v610
        %1315 = vst [vmem:[%s234 + $0x98] sm:$0xff] %v612
        %1316 = vst [vmem:[%s234 + $0xa0] sm:$0xff] %v867
        %1317 = vst [vmem:[%s234 + $0xa8] sm:$0xff] %v869
        %1318 = vst [vmem:[%s234 + $0xb0] sm:$0xff] %v1124
        %1319 = vst [vmem:[%s234 + $0xb8] sm:$0xff] %v1126
        %1320 = vst [vmem:[%s234 + $0xc0] sm:$0xff] %v616
        %1321 = vst [vmem:[%s234 + $0xc8] sm:$0xff] %v618
        %1322 = vst [vmem:[%s234 + $0xd0] sm:$0xff] %v873
        %1323 = vst [vmem:[%s234 + $0xd8] sm:$0xff] %v875
        %1324 = vst [vmem:[%s234 + $0xe0] sm:$0xff] %v1130
        %1325 = vst [vmem:[%s234 + $0xe8] sm:$0xff] %v1132
        %1326 = vst [vmem:[%s234 + $0xf0] sm:$0xff] %v622
        %1327 = vst [vmem:[%s234 + $0xf8] sm:$0xff] %v624
        %1328 = vst [vmem:[%s234 + $0x100] sm:$0xff] %v879
        %1329 = vst [vmem:[%s234 + $0x108] sm:$0xff] %v881
        %1330 = vst [vmem:[%s234 + $0x110] sm:$0xff] %v1136
        %1331 = vst [vmem:[%s234 + $0x118] sm:$0xff] %v1138
        %1332 = vst [vmem:[%s234 + $0x120] sm:$0xff] %v628
        %1333 = vst [vmem:[%s234 + $0x128] sm:$0xff] %v630
        %1334 = vst [vmem:[%s234 + $0x130] sm:$0xff] %v885
        %1335 = vst [vmem:[%s234 + $0x138] sm:$0xff] %v887
        %1336 = vst [vmem:[%s234 + $0x140] sm:$0xff] %v1142
        %1337 = vst [vmem:[%s234 + $0x148] sm:$0xff] %v1144
        %1338 = vst [vmem:[%s234 + $0x150] sm:$0xff] %v634
        %1339 = vst [vmem:[%s234 + $0x158] sm:$0xff] %v636
        %1340 = vst [vmem:[%s234 + $0x160] sm:$0xff] %v891
        %1341 = vst [vmem:[%s234 + $0x168] sm:$0xff] %v893
        %1342 = vst [vmem:[%s234 + $0x170] sm:$0xff] %v1148
        %1343 = vst [vmem:[%s234 + $0x178] sm:$0xff] %v1150
        %1344 = vst [vmem:[%s234 + $0x180] sm:$0xff] %v640
        %1345 = vst [vmem:[%s234 + $0x188] sm:$0xff] %v642
        %1346 = vst [vmem:[%s234 + $0x190] sm:$0xff] %v897
        %1347 = vst [vmem:[%s234 + $0x198] sm:$0xff] %v899
        %1348 = vst [vmem:[%s234 + $0x1a0] sm:$0xff] %v1154
        %1349 = vst [vmem:[%s234 + $0x1a8] sm:$0xff] %v1156
        %1350 = vst [vmem:[%s234 + $0x1b0] sm:$0xff] %v646
        %1351 = vst [vmem:[%s234 + $0x1b8] sm:$0xff] %v648
        %1352 = vst [vmem:[%s234 + $0x1c0] sm:$0xff] %v903
        %1353 = vst [vmem:[%s234 + $0x1c8] sm:$0xff] %v905
        %1354 = vst [vmem:[%s234 + $0x1d0] sm:$0xff] %v1160
        %1355 = vst [vmem:[%s234 + $0x1d8] sm:$0xff] %v1162
        %1356 = vst [vmem:[%s234 + $0x1e0] sm:$0xff] %v652
        %1357 = vst [vmem:[%s234 + $0x1e8] sm:$0xff] %v654
        %1358 = vst [vmem:[%s234 + $0x1f0] sm:$0xff] %v909
        %1359 = vst [vmem:[%s234 + $0x1f8] sm:$0xff] %v911
        %1360 = vst [vmem:[%s234 + $0x200] sm:$0xff] %v1166
        %1361 = vst [vmem:[%s234 + $0x208] sm:$0xff] %v1168
        %1362 = vst [vmem:[%s234 + $0x210] sm:$0xff] %v658
        %1363 = vst [vmem:[%s234 + $0x218] sm:$0xff] %v660
        %1364 = vst [vmem:[%s234 + $0x220] sm:$0xff] %v915
        %1365 = vst [vmem:[%s234 + $0x228] sm:$0xff] %v917
        %1366 = vst [vmem:[%s234 + $0x230] sm:$0xff] %v1172
        %1367 = vst [vmem:[%s234 + $0x238] sm:$0xff] %v1174
        %1368 = vst [vmem:[%s234 + $0x240] sm:$0xff] %v664
        %1369 = vst [vmem:[%s234 + $0x248] sm:$0xff] %v666
        %1370 = vst [vmem:[%s234 + $0x250] sm:$0xff] %v921
        %1371 = vst [vmem:[%s234 + $0x258] sm:$0xff] %v923
        %1372 = vst [vmem:[%s234 + $0x260] sm:$0xff] %v1178
        %1373 = vst [vmem:[%s234 + $0x268] sm:$0xff] %v1180
        %1374 = vst [vmem:[%s234 + $0x270] sm:$0xff] %v670
        %1375 = vst [vmem:[%s234 + $0x278] sm:$0xff] %v672
        %1376 = vst [vmem:[%s234 + $0x280] sm:$0xff] %v927
        %1377 = vst [vmem:[%s234 + $0x288] sm:$0xff] %v929
        %1378 = vst [vmem:[%s234 + $0x290] sm:$0xff] %v1184
        %1379 = vst [vmem:[%s234 + $0x298] sm:$0xff] %v1186
        %1380 = vst [vmem:[%s234 + $0x2a0] sm:$0xff] %v676
        %1381 = vst [vmem:[%s234 + $0x2a8] sm:$0xff] %v678
        %1382 = vst [vmem:[%s234 + $0x2b0] sm:$0xff] %v933
        %1383 = vst [vmem:[%s234 + $0x2b8] sm:$0xff] %v935
        %1384 = vst [vmem:[%s234 + $0x2c0] sm:$0xff] %v1190
        %1385 = vst [vmem:[%s234 + $0x2c8] sm:$0xff] %v1192
        %1386 = vst [vmem:[%s234 + $0x2d0] sm:$0xff] %v682
        %1387 = vst [vmem:[%s234 + $0x2d8] sm:$0xff] %v684
        %1388 = vst [vmem:[%s234 + $0x2e0] sm:$0xff] %v939
        %1389 = vst [vmem:[%s234 + $0x2e8] sm:$0xff] %v941
        %1390 = vst [vmem:[%s234 + $0x2f0] sm:$0xff] %v1196
        %1391 = vst [vmem:[%s234 + $0x2f8] sm:$0xff] %v1198
        %1392 = vst [vmem:[%s234 + $0x300] sm:$0xff] %v688
        %1393 = vst [vmem:[%s234 + $0x308] sm:$0xff] %v690
        %1394 = vst [vmem:[%s234 + $0x310] sm:$0xff] %v945
        %1395 = vst [vmem:[%s234 + $0x318] sm:$0xff] %v947
        %1396 = vst [vmem:[%s234 + $0x320] sm:$0xff] %v1202
        %1397 = vst [vmem:[%s234 + $0x328] sm:$0xff] %v1204
        %1398 = vst [vmem:[%s234 + $0x330] sm:$0xff] %v694
        %1399 = vst [vmem:[%s234 + $0x338] sm:$0xff] %v696
        %1400 = vst [vmem:[%s234 + $0x340] sm:$0xff] %v951
        %1401 = vst [vmem:[%s234 + $0x348] sm:$0xff] %v953
        %1402 = vst [vmem:[%s234 + $0x350] sm:$0xff] %v1208
        %1403 = vst [vmem:[%s234 + $0x358] sm:$0xff] %v1210
        %1404 = vst [vmem:[%s234 + $0x360] sm:$0xff] %v700
        %1405 = vst [vmem:[%s234 + $0x368] sm:$0xff] %v702
        %1406 = vst [vmem:[%s234 + $0x370] sm:$0xff] %v957
        %1407 = vst [vmem:[%s234 + $0x378] sm:$0xff] %v959
        %1408 = vst [vmem:[%s234 + $0x380] sm:$0xff] %v1214
        %1409 = vst [vmem:[%s234 + $0x388] sm:$0xff] %v1216
        %1410 = vst [vmem:[%s234 + $0x390] sm:$0xff] %v706
        %1411 = vst [vmem:[%s234 + $0x398] sm:$0xff] %v708
        %1412 = vst [vmem:[%s234 + $0x3a0] sm:$0xff] %v963
        %1413 = vst [vmem:[%s234 + $0x3a8] sm:$0xff] %v965
        %1414 = vst [vmem:[%s234 + $0x3b0] sm:$0xff] %v1220
        %1415 = vst [vmem:[%s234 + $0x3b8] sm:$0xff] %v1222
        %1416 = vst [vmem:[%s234 + $0x3c0] sm:$0xff] %v712
        %1417 = vst [vmem:[%s234 + $0x3c8] sm:$0xff] %v714
        %1418 = vst [vmem:[%s234 + $0x3d0] sm:$0xff] %v969
        %1419 = vst [vmem:[%s234 + $0x3d8] sm:$0xff] %v971
        %1420 = vst [vmem:[%s234 + $0x3e0] sm:$0xff] %v1226
        %1421 = vst [vmem:[%s234 + $0x3e8] sm:$0xff] %v1228
        %1422 = vst [vmem:[%s234 + $0x3f0] sm:$0xff] %v718
        %1423 = vst [vmem:[%s234 + $0x3f8] sm:$0xff] %v720
        %1424 = vst [vmem:[%s234 + $0x400] sm:$0xff] %v975
        %1425 = vst [vmem:[%s234 + $0x408] sm:$0xff] %v977
        %1426 = vst [vmem:[%s234 + $0x410] sm:$0xff] %v1232
        %1427 = vst [vmem:[%s234 + $0x418] sm:$0xff] %v1234
        %1428 = vst [vmem:[%s234 + $0x420] sm:$0xff] %v724
        %1429 = vst [vmem:[%s234 + $0x428] sm:$0xff] %v726
        %1430 = vst [vmem:[%s234 + $0x430] sm:$0xff] %v981
        %1431 = vst [vmem:[%s234 + $0x438] sm:$0xff] %v983
        %1432 = vst [vmem:[%s234 + $0x440] sm:$0xff] %v1238
        %1433 = vst [vmem:[%s234 + $0x448] sm:$0xff] %v1240
        %1434 = vst [vmem:[%s234 + $0x450] sm:$0xff] %v730
        %1435 = vst [vmem:[%s234 + $0x458] sm:$0xff] %v732
        %1436 = vst [vmem:[%s234 + $0x460] sm:$0xff] %v987
        %1437 = vst [vmem:[%s234 + $0x468] sm:$0xff] %v989
        %1438 = vst [vmem:[%s234 + $0x470] sm:$0xff] %v1244
        %1439 = vst [vmem:[%s234 + $0x478] sm:$0xff] %v1246
        %1440 = vst [vmem:[%s234 + $0x480] sm:$0xff] %v736
        %1441 = vst [vmem:[%s234 + $0x488] sm:$0xff] %v738
        %1442 = vst [vmem:[%s234 + $0x490] sm:$0xff] %v993
        %1443 = vst [vmem:[%s234 + $0x498] sm:$0xff] %v995
        %1444 = vst [vmem:[%s234 + $0x4a0] sm:$0xff] %v1250
        %1445 = vst [vmem:[%s234 + $0x4a8] sm:$0xff] %v1252
        %1446 = vst [vmem:[%s234 + $0x4b0] sm:$0xff] %v742
        %1447 = vst [vmem:[%s234 + $0x4b8] sm:$0xff] %v744
        %1448 = vst [vmem:[%s234 + $0x4c0] sm:$0xff] %v999
        %1449 = vst [vmem:[%s234 + $0x4c8] sm:$0xff] %v1001
        %1450 = vst [vmem:[%s234 + $0x4d0] sm:$0xff] %v1256
        %1451 = vst [vmem:[%s234 + $0x4d8] sm:$0xff] %v1258
        %1452 = vst [vmem:[%s234 + $0x4e0] sm:$0xff] %v748
        %1453 = vst [vmem:[%s234 + $0x4e8] sm:$0xff] %v750
        %1454 = vst [vmem:[%s234 + $0x4f0] sm:$0xff] %v1005
        %1455 = vst [vmem:[%s234 + $0x4f8] sm:$0xff] %v1007
        %1456 = vst [vmem:[%s234 + $0x500] sm:$0xff] %v1262
        %1457 = vst [vmem:[%s234 + $0x508] sm:$0xff] %v1264
        %1458 = vst [vmem:[%s234 + $0x510] sm:$0xff] %v754
        %1459 = vst [vmem:[%s234 + $0x518] sm:$0xff] %v756
        %1460 = vst [vmem:[%s234 + $0x520] sm:$0xff] %v1011
        %1461 = vst [vmem:[%s234 + $0x528] sm:$0xff] %v1013
        %1462 = vst [vmem:[%s234 + $0x530] sm:$0xff] %v1268
        %1463 = vst [vmem:[%s234 + $0x538] sm:$0xff] %v1270
        %1464 = vst [vmem:[%s234 + $0x540] sm:$0xff] %v760
        %1465 = vst [vmem:[%s234 + $0x548] sm:$0xff] %v762
        %1466 = vst [vmem:[%s234 + $0x550] sm:$0xff] %v1017
        %1467 = vst [vmem:[%s234 + $0x558] sm:$0xff] %v1019
        %1468 = vst [vmem:[%s234 + $0x560] sm:$0xff] %v1274
        %1469 = vst [vmem:[%s234 + $0x568] sm:$0xff] %v1276
        %1470 = vst [vmem:[%s234 + $0x570] sm:$0xff] %v766
        %1471 = vst [vmem:[%s234 + $0x578] sm:$0xff] %v768
        %1472 = vst [vmem:[%s234 + $0x580] sm:$0xff] %v1023
        %1473 = vst [vmem:[%s234 + $0x588] sm:$0xff] %v1025
        %1474 = vst [vmem:[%s234 + $0x590] sm:$0xff] %v1280
        %1475 = vst [vmem:[%s234 + $0x598] sm:$0xff] %v1282
        %1476 = vst [vmem:[%s234 + $0x5a0] sm:$0xff] %v772
        %1477 = vst [vmem:[%s234 + $0x5a8] sm:$0xff] %v774
        %1478 = vst [vmem:[%s234 + $0x5b0] sm:$0xff] %v1029
        %1479 = vst [vmem:[%s234 + $0x5b8] sm:$0xff] %v1031
        %1480 = vst [vmem:[%s234 + $0x5c0] sm:$0xff] %v1286
        %1481 = vst [vmem:[%s234 + $0x5c8] sm:$0xff] %v1288
        %1482 = vst [vmem:[%s234 + $0x5d0] sm:$0xff] %v778
        %1483 = vst [vmem:[%s234 + $0x5d8] sm:$0xff] %v780
        %1484 = vst [vmem:[%s234 + $0x5e0] sm:$0xff] %v1035
        %1485 = vst [vmem:[%s234 + $0x5e8] sm:$0xff] %v1037
        %1486 = vst [vmem:[%s234 + $0x5f0] sm:$0xff] %v1292
        %1487 = vst [vmem:[%s234 + $0x5f8] sm:$0xff] %v1294
        %s1488 = sand.u32 %s113, 1
        %s1489 = scalar_lea.sflag [#allocation4], %s1488
        %s1490 = sand.u32 %s113, 1
        %s1491 = smul.addr %s1490, 1536
        %s1492 = scalar_lea.vmem [#allocation8], %s1491
        // Predicated region
        $region45: #{tpu_custom_call.1} parent=31 // pred_check
          %p1493 = pneg %p123
        $region46: #{tpu_custom_call.1} parent=31 // pred_check_branch
          %1495 = sbr.rel (%p1493) target = $region48
        $region47: #{tpu_custom_call.1} parent=31 // pred_region
          %s1496 = smul.u32 32, %s26
          %s1498 = ssub.s32 24576, 24576
          %1499 = vsyncadd %s1489, %s1498
          %s1500 = smul.addr %s1496, 6
          %s1501 = smul.addr %s25, 192
          %s1502 = sadd.s32 %s1500, %s1501
          %s1503 = smul.addr %s1502, 128
          %s1504 = scalar_lea.hbm %s3, %s1503
          %s1505 = sshll.u32 %s1492, 4
          %s1506 = int_to_ptr.vmem [resolvable:$true] %s1505
          %1511 = dma.vmem_to_hbm [thread:$0]  %s1506, 24576, %s1504, %s1489, 768, 768, 48
        $region48: #{tpu_custom_call.1} parent=31 // pred_fallthru
          _
      $region32: #{tpu_custom_call.1} parent=5 // pred_fallthru
        _
      %p1512 = scmp.le.s32.totalorder 2, %s16
      // Predicated region
      $region49: #{tpu_custom_call.1} parent=5 // pred_check
        %p1513 = pneg %p1512
      $region50: #{tpu_custom_call.1} parent=5 // pred_check_branch
        %1515 = sbr.rel (%p1513) target = $region52
      $region51: #{tpu_custom_call.1} parent=5 // pred_region
        %s1516 = ssub.s32 %s16, 2
        // Predicated region
        $region53: #{tpu_custom_call.1} parent=51 // pred_check
          %p1517 = pneg %p129
        $region54: #{tpu_custom_call.1} parent=51 // pred_check_branch
          %1519 = sbr.rel (%p1517) target = $region56
        $region55: #{tpu_custom_call.1} parent=51 // pred_region
          %s1520 = sand.u32 %s114, 1
          %s1521 = scalar_lea.sflag [#allocation4], %s1520
          %s1522 = sand.u32 %s114, 1
          %s1523 = smul.addr %s1522, 1536
          %s1524 = scalar_lea.vmem [#allocation8], %s1523
          %1525 = dma.done %s1521, 24576
        $region56: #{tpu_custom_call.1} parent=51 // pred_fallthru
          _
      $region52: #{tpu_custom_call.1} parent=5 // pred_fallthru
        _
    $region6: #{tpu_custom_call.1} parent=1 // loop_footer
      %s20 = sadd.s32 1, %s16
    $region7: #{tpu_custom_call.1} parent=1 // loop_footer_branch
      %15 = sbr.rel target = $region3
    $region8: #{tpu_custom_call.1} parent=1 // loop_exit
      _
    %1526 = vsyncpa [#allocation3], 1
    %s1527 = scalar_lea.sflag [#allocation3], 1
    %1528 = vsyncpa %s1527, 1
    %1529 = vsyncpa [#allocation6], 1
    %1530 = vsyncpa [#allocation4], 1
    %s1531 = scalar_lea.sflag [#allocation4], 1
    %1532 = vsyncpa %s1531, 1

</llo_original>
